<compile_context>
chip_gen: v7x
topology: tpu7x:2x2x1
jax: 0.10.0
libtpu: 0.0.40
codegen_flags: <defaults>
</compile_context>

<pallas_src>
import functools

import jax
import jax.numpy as jnp
from jax.experimental import pallas as pl
from jax.experimental.pallas import tpu as pltpu

HIDDEN = 1024
HCHUNK = 256                      # hidden rows per unrolled chunk (1024/256 = 4)


def _mlp_kernel(x_ref, w1_ref, b1_ref, w2_ref, b2_ref, o_ref):
    # x_ref : [1, TM]        VMEM   (batch on lanes)
    # w1_ref: [HIDDEN, 1]    VMEM   (layer1.weight, resident across grid)
    # b1_ref: [HIDDEN, 1]    VMEM   (layer1.bias,   resident)
    # w2_ref: [8, HIDDEN]    VMEM   (layer2.weight row, rows 1..7 zero, resident)
    # b2_ref: [1]            SMEM   (layer2.bias scalar)
    # o_ref : [1, TM]        VMEM
    x = x_ref[...]                                   # [1, TM], compute dtype
    tm = x.shape[1]

    # f32 accumulator for the layer-2 contraction; [8, TM] keeps vregs fully
    # occupied and matches the sublane-padded MXU output (only row 0 is real).
    acc = jnp.zeros((8, tm), jnp.float32)

    # Unrolled loop over hidden chunks: static slices (zero-cost ref views),
    # chunk-sized live intermediates instead of full [HIDDEN, TM] temporaries,
    # and the MXU dot of chunk c overlaps the VPU work of chunk c+1.
    for c in range(HIDDEN // HCHUNK):
        lo = c * HCHUNK
        w1_c = w1_ref[lo:lo + HCHUNK, :]             # [HC, 1]
        b1_c = b1_ref[lo:lo + HCHUNK, :]             # [HC, 1]

        # layer1 (Linear(1 -> 1024)) + ReLU as a rank-1 VPU outer product:
        #   h[j, b] = relu(w1[j] * x[b] + b1[j])
        h_c = jnp.maximum(w1_c * x + b1_c, 0.0)      # [HC, TM]

        # Dropout(p=0.25): identity in eval mode (see TODO above).

        # layer2 (Linear(1024 -> 1)) partial contraction on the MXU
        # (vex slot -> VALU stays free); f32 accumulation regardless of the
        # elementwise compute dtype.
        w2_c = w2_ref[:, lo:lo + HCHUNK]             # [8, HC]
        acc = acc + jnp.dot(w2_c, h_c, preferred_element_type=jnp.float32)

    # Scalar bias from SMEM, lane-dense store of row 0 only.
    o_ref[...] = (acc[0:1, :] + b2_ref[0]).astype(o_ref.dtype)


def _round_up(a: int, b: int) -> int:
    return ((a + b - 1) // b) * b


@functools.partial(jax.jit, static_argnames=("tm", "use_bf16"))
def linear_regression_forward(x, w1, b1, w2, b2, *, tm=2048, use_bf16=False):
    """Forward pass of LinearRegression (eval mode).

    Args (PyTorch-native parameter layouts):
      x : [N, 1] f32
      w1: [1024, 1]  == layer1.weight
      b1: [1024]     == layer1.bias
      w2: [1, 1024]  == layer2.weight
      b2: [1]        == layer2.bias
      tm: batch tile (lanes per grid step).  With hidden chunking the live
          intermediates are only [HCHUNK, tm], so tm=2048 is safe on all gens
          (incl. v7x's 64 MiB VMEM).
      use_bf16: do the layer-1 elementwise chain and MXU inputs in bf16
          (recommended on v6e/v7x; keep False on v5e).  The layer-2 dot always
          accumulates in f32.
    Returns: [N, 1] f32
    """
    n = x.shape[0]
    cdt = jnp.bfloat16 if use_bf16 else jnp.float32

    n_pad128 = _round_up(n, 128)
    tm_eff = max(128, min(_round_up(tm, 128), n_pad128))
    # v7x megacore: prefer >= 2 "parallel" grid steps whenever the padded
    # batch allows it, so both TensorCores get work (no effect on v5e/v6e).
    if tm_eff >= n_pad128 and n_pad128 >= 256:
        tm_eff = _round_up(n_pad128 // 2, 128)
    n_pad = _round_up(n, tm_eff)

    # Lane-dense I/O: present the batch on the lane dimension.
    x_row = jnp.pad(x.reshape(1, n).astype(cdt), ((0, 0), (0, n_pad - n)))

    # Kernel-side parameter layouts.
    w1_col = w1.reshape(HIDDEN, 1).astype(cdt)         # hidden on sublanes
    b1_col = b1.reshape(HIDDEN, 1).astype(cdt)
    # layer2.weight as a lane-dense row, sublane-padded to 8 rows (rows 1..7
    # zero) so the MXU dot has fully aligned [8, HC] x [HC, TM] shapes.
    w2_row = jnp.pad(w2.reshape(1, HIDDEN).astype(cdt), ((0, 7), (0, 0)))
    b2_vec = b2.reshape(1).astype(jnp.float32)

    y_row = pl.pallas_call(
        _mlp_kernel,
        out_shape=jax.ShapeDtypeStruct((1, n_pad), jnp.float32),
        grid=(n_pad // tm_eff,),
        in_specs=[
            pl.BlockSpec((1, tm_eff), lambda i: (0, i)),        # x tile
            pl.BlockSpec((HIDDEN, 1), lambda i: (0, 0)),        # w1 (resident)
            pl.BlockSpec((HIDDEN, 1), lambda i: (0, 0)),        # b1 (resident)
            pl.BlockSpec((8, HIDDEN), lambda i: (0, 0)),        # w2 row (resident)
            pl.BlockSpec(memory_space=pltpu.MemorySpace.SMEM),  # b2 scalar
        ],
        out_specs=pl.BlockSpec((1, tm_eff), lambda i: (0, i)),
        compiler_params=pltpu.CompilerParams(
            dimension_semantics=("parallel",),
            vmem_limit_bytes=48 << 20,
        ),
    )(x_row, w1_col, b1_col, w2_row, b2_vec)

    return y_row[:, :n].reshape(n, 1)


def _reference(x, w1, b1, w2, b2):
    h = jnp.maximum(
        jnp.dot(x, w1.T, precision="highest") + b1, 0.0)          # [N, 1024]
    return jnp.dot(h, w2.T, precision="highest") + b2             # [N, 1]


if __name__ == "__main__":
    key = jax.random.PRNGKey(0)
    k_x, k_w1, k_b1, k_w2, k_b2 = jax.random.split(key, 5)

    N = 300  # small batch; deliberately not a multiple of 128 to test padding
    x = jax.random.normal(k_x, (N, 1), dtype=jnp.float32)

    # Deterministic init mimicking nn.Linear's U(-1/sqrt(fan_in), 1/sqrt(fan_in))
    bound1 = 1.0  # fan_in = 1
    w1 = jax.random.uniform(k_w1, (HIDDEN, 1), jnp.float32, -bound1, bound1)
    b1 = jax.random.uniform(k_b1, (HIDDEN,), jnp.float32, -bound1, bound1)

    bound2 = 1.0 / (HIDDEN ** 0.5)
    w2 = jax.random.uniform(k_w2, (1, HIDDEN), jnp.float32, -bound2, bound2)
    b2 = jax.random.uniform(k_b2, (1,), jnp.float32, -bound2, bound2)

    ref = _reference(x, w1, b1, w2, b2)

    # Default tile: exercises the "at least 2 parallel grid steps" path.
    out = jax.block_until_ready(linear_regression_forward(x, w1, b1, w2, b2))
    assert out.shape == (N, 1)
    assert jnp.allclose(out, ref, atol=2e-3, rtol=2e-3), "mismatch (default tile)"

    # Small tile to exercise the multi-step parallel grid + padding path.
    out_tiled = jax.block_until_ready(
        linear_regression_forward(x, w1, b1, w2, b2, tm=128))
    assert jnp.allclose(out_tiled, ref, atol=2e-3, rtol=2e-3), "mismatch (tm=128)"

    # bf16 elementwise / MXU-input path (v6e/v7x oriented); f32 accumulation.
    out_bf16 = jax.block_until_ready(
        linear_regression_forward(x, w1, b1, w2, b2, use_bf16=True))
    assert jnp.allclose(out_bf16, ref, atol=3e-2, rtol=3e-2), "mismatch (bf16)"

    print("KERNEL_OK")
</pallas_src>

<mosaic_0001>
module attributes {stable_mosaic.version = 11 : i64} {
  func.func @_mlp_kernel(%arg0: i32, %arg1: memref<1x256xf32, #tpu.memory_space<vmem>>, %arg2: memref<1024x1xf32, #tpu.memory_space<vmem>>, %arg3: memref<1024x1xf32, #tpu.memory_space<vmem>>, %arg4: memref<8x1024xf32, #tpu.memory_space<vmem>>, %arg5: memref<1xf32, #tpu.memory_space<smem>>, %arg6: memref<1x256xf32, #tpu.memory_space<vmem>>) attributes {dimension_semantics = [#tpu.dimension_semantics<parallel>], iteration_bounds = array<i64: 2>, scalar_prefetch = 0 : i64, scratch_operands = 0 : i64, tpu.core_type = #tpu.core_type<tc>, window_params = [{transform_indices = @transform_0, window_bounds = array<i64: 1, 256>}, {pipeline_mode = #tpu.pipeline_mode<synchronous>, transform_indices = @transform_1, window_bounds = array<i64: 1024, 1>}, {pipeline_mode = #tpu.pipeline_mode<synchronous>, transform_indices = @transform_2, window_bounds = array<i64: 1024, 1>}, {pipeline_mode = #tpu.pipeline_mode<synchronous>, transform_indices = @transform_3, window_bounds = array<i64: 8, 1024>}, {transform_indices = @transform_4, window_bounds = array<i64: 1>}, {transform_indices = @transform_5, window_bounds = array<i64: 1, 256>}]} {
    %c0 = arith.constant 0 : index
    %c0_0 = arith.constant 0 : index
    %0 = vector.load %arg1[%c0, %c0_0] : memref<1x256xf32, #tpu.memory_space<vmem>>, vector<1x256xf32>
    %cst = arith.constant 0.000000e+00 : f32
    %1 = vector.broadcast %cst : f32 to vector<8x256xf32>
    %c0_1 = arith.constant 0 : index
    %c0_2 = arith.constant 0 : index
    %2 = vector.load %arg2[%c0_1, %c0_2] : memref<1024x1xf32, #tpu.memory_space<vmem>>, vector<256x1xf32>
    %c0_3 = arith.constant 0 : index
    %c0_4 = arith.constant 0 : index
    %3 = vector.load %arg3[%c0_3, %c0_4] : memref<1024x1xf32, #tpu.memory_space<vmem>>, vector<256x1xf32>
    %4 = vector.broadcast %2 : vector<256x1xf32> to vector<256x256xf32>
    %5 = vector.broadcast %0 : vector<1x256xf32> to vector<256x256xf32>
    %6 = arith.mulf %4, %5 : vector<256x256xf32>
    %7 = vector.broadcast %3 : vector<256x1xf32> to vector<256x256xf32>
    %8 = arith.addf %6, %7 : vector<256x256xf32>
    %cst_5 = arith.constant 0.000000e+00 : f32
    %9 = vector.broadcast %cst_5 : f32 to vector<256x256xf32>
    %10 = arith.maximumf %8, %9 : vector<256x256xf32>
    %c0_6 = arith.constant 0 : index
    %c0_7 = arith.constant 0 : index
    %11 = vector.load %arg4[%c0_6, %c0_7] : memref<8x1024xf32, #tpu.memory_space<vmem>>, vector<8x256xf32>
    %cst_8 = arith.constant dense<0.000000e+00> : vector<8x256xf32>
    %12 = tpu.matmul %11, %10, %cst_8 {dimension_numbers = #tpu.dot_dimension_numbers<[1], [0], [0], [1], [0, 0, 1, 1], [], []>} : vector<8x256xf32>, vector<256x256xf32>, vector<8x256xf32> -> vector<8x256xf32>
    %13 = arith.addf %1, %12 : vector<8x256xf32>
    %c256 = arith.constant 256 : index
    %c0_9 = arith.constant 0 : index
    %14 = vector.load %arg2[%c256, %c0_9] : memref<1024x1xf32, #tpu.memory_space<vmem>>, vector<256x1xf32>
    %c256_10 = arith.constant 256 : index
    %c0_11 = arith.constant 0 : index
    %15 = vector.load %arg3[%c256_10, %c0_11] : memref<1024x1xf32, #tpu.memory_space<vmem>>, vector<256x1xf32>
    %16 = vector.broadcast %14 : vector<256x1xf32> to vector<256x256xf32>
    %17 = vector.broadcast %0 : vector<1x256xf32> to vector<256x256xf32>
    %18 = arith.mulf %16, %17 : vector<256x256xf32>
    %19 = vector.broadcast %15 : vector<256x1xf32> to vector<256x256xf32>
    %20 = arith.addf %18, %19 : vector<256x256xf32>
    %cst_12 = arith.constant 0.000000e+00 : f32
    %21 = vector.broadcast %cst_12 : f32 to vector<256x256xf32>
    %22 = arith.maximumf %20, %21 : vector<256x256xf32>
    %c0_13 = arith.constant 0 : index
    %c256_14 = arith.constant 256 : index
    %23 = vector.load %arg4[%c0_13, %c256_14] : memref<8x1024xf32, #tpu.memory_space<vmem>>, vector<8x256xf32>
    %cst_15 = arith.constant dense<0.000000e+00> : vector<8x256xf32>
    %24 = tpu.matmul %23, %22, %cst_15 {dimension_numbers = #tpu.dot_dimension_numbers<[1], [0], [0], [1], [0, 0, 1, 1], [], []>} : vector<8x256xf32>, vector<256x256xf32>, vector<8x256xf32> -> vector<8x256xf32>
    %25 = arith.addf %13, %24 : vector<8x256xf32>
    %c512 = arith.constant 512 : index
    %c0_16 = arith.constant 0 : index
    %26 = vector.load %arg2[%c512, %c0_16] : memref<1024x1xf32, #tpu.memory_space<vmem>>, vector<256x1xf32>
    %c512_17 = arith.constant 512 : index
    %c0_18 = arith.constant 0 : index
    %27 = vector.load %arg3[%c512_17, %c0_18] : memref<1024x1xf32, #tpu.memory_space<vmem>>, vector<256x1xf32>
    %28 = vector.broadcast %26 : vector<256x1xf32> to vector<256x256xf32>
    %29 = vector.broadcast %0 : vector<1x256xf32> to vector<256x256xf32>
    %30 = arith.mulf %28, %29 : vector<256x256xf32>
    %31 = vector.broadcast %27 : vector<256x1xf32> to vector<256x256xf32>
    %32 = arith.addf %30, %31 : vector<256x256xf32>
    %cst_19 = arith.constant 0.000000e+00 : f32
    %33 = vector.broadcast %cst_19 : f32 to vector<256x256xf32>
    %34 = arith.maximumf %32, %33 : vector<256x256xf32>
    %c0_20 = arith.constant 0 : index
    %c512_21 = arith.constant 512 : index
    %35 = vector.load %arg4[%c0_20, %c512_21] : memref<8x1024xf32, #tpu.memory_space<vmem>>, vector<8x256xf32>
    %cst_22 = arith.constant dense<0.000000e+00> : vector<8x256xf32>
    %36 = tpu.matmul %35, %34, %cst_22 {dimension_numbers = #tpu.dot_dimension_numbers<[1], [0], [0], [1], [0, 0, 1, 1], [], []>} : vector<8x256xf32>, vector<256x256xf32>, vector<8x256xf32> -> vector<8x256xf32>
    %37 = arith.addf %25, %36 : vector<8x256xf32>
    %c768 = arith.constant 768 : index
    %c0_23 = arith.constant 0 : index
    %38 = vector.load %arg2[%c768, %c0_23] : memref<1024x1xf32, #tpu.memory_space<vmem>>, vector<256x1xf32>
    %c768_24 = arith.constant 768 : index
    %c0_25 = arith.constant 0 : index
    %39 = vector.load %arg3[%c768_24, %c0_25] : memref<1024x1xf32, #tpu.memory_space<vmem>>, vector<256x1xf32>
    %40 = vector.broadcast %38 : vector<256x1xf32> to vector<256x256xf32>
    %41 = vector.broadcast %0 : vector<1x256xf32> to vector<256x256xf32>
    %42 = arith.mulf %40, %41 : vector<256x256xf32>
    %43 = vector.broadcast %39 : vector<256x1xf32> to vector<256x256xf32>
    %44 = arith.addf %42, %43 : vector<256x256xf32>
    %cst_26 = arith.constant 0.000000e+00 : f32
    %45 = vector.broadcast %cst_26 : f32 to vector<256x256xf32>
    %46 = arith.maximumf %44, %45 : vector<256x256xf32>
    %c0_27 = arith.constant 0 : index
    %c768_28 = arith.constant 768 : index
    %47 = vector.load %arg4[%c0_27, %c768_28] : memref<8x1024xf32, #tpu.memory_space<vmem>>, vector<8x256xf32>
    %cst_29 = arith.constant dense<0.000000e+00> : vector<8x256xf32>
    %48 = tpu.matmul %47, %46, %cst_29 {dimension_numbers = #tpu.dot_dimension_numbers<[1], [0], [0], [1], [0, 0, 1, 1], [], []>} : vector<8x256xf32>, vector<256x256xf32>, vector<8x256xf32> -> vector<8x256xf32>
    %49 = arith.addf %37, %48 : vector<8x256xf32>
    %50 = vector.extract_strided_slice %49 {offsets = [0, 0], sizes = [1, 256], strides = [1, 1]} : vector<8x256xf32> to vector<1x256xf32>
    %c0_30 = arith.constant 0 : index
    %51 = memref.load %arg5[%c0_30] : memref<1xf32, #tpu.memory_space<smem>>
    %52 = vector.broadcast %51 : f32 to vector<1x256xf32>
    %53 = arith.addf %50, %52 : vector<1x256xf32>
    %c0_31 = arith.constant 0 : index
    %c0_32 = arith.constant 0 : index
    %54 = vector.load %arg6[%c0_31, %c0_32] : memref<1x256xf32, #tpu.memory_space<vmem>>, vector<1x256xf32>
    tpu.vector_store %arg6[%c0_31, %c0_32], %53 {strides = array<i32>} : memref<1x256xf32, #tpu.memory_space<vmem>>, vector<1x256xf32>,
    return
  }
  func.func @transform_0(%arg0: i32) -> (i32, i32) {
    %c0_i32 = arith.constant 0 : i32
    %c0_i32_0 = arith.constant 0 : i32
    return %c0_i32, %arg0 : i32, i32
  }
  func.func @transform_1(%arg0: i32) -> (i32, i32) {
    %c0_i32 = arith.constant 0 : i32
    %c0_i32_0 = arith.constant 0 : i32
    %c0_i32_1 = arith.constant 0 : i32
    return %c0_i32, %c0_i32_0 : i32, i32
  }
  func.func @transform_2(%arg0: i32) -> (i32, i32) {
    %c0_i32 = arith.constant 0 : i32
    %c0_i32_0 = arith.constant 0 : i32
    %c0_i32_1 = arith.constant 0 : i32
    return %c0_i32, %c0_i32_0 : i32, i32
  }
  func.func @transform_3(%arg0: i32) -> (i32, i32) {
    %c0_i32 = arith.constant 0 : i32
    %c0_i32_0 = arith.constant 0 : i32
    %c0_i32_1 = arith.constant 0 : i32
    return %c0_i32, %c0_i32_0 : i32, i32
  }
  func.func @transform_4(%arg0: i32) -> i32 {
    %c0_i32 = arith.constant 0 : i32
    %c0_i32_0 = arith.constant 0 : i32
    return %c0_i32 : i32
  }
  func.func @transform_5(%arg0: i32) -> (i32, i32) {
    %c0_i32 = arith.constant 0 : i32
    %c0_i32_0 = arith.constant 0 : i32
    return %c0_i32, %arg0 : i32, i32
  }
}

</mosaic_0001>

<llo_original>
// kernel: linear_regression_forward.1
$region0: #{linear_regression_forward.1}
  #allocation0 [shape = 'u32[]', space=smem, size = 0x4, offset = 0x4, fixed_abs, tag = 'smem constant byte address 0x4 - core index']
  #allocation1 [shape = 'u32[144,128]{1,0:T(1,128)}', space=vmem, size = 0x12000, scoped, tag = 'internal scratch']
  #allocation2 [shape = 'f32[1]{0:T(128)S(6)}', space=smem, size = 0x200, scoped, tag = 'scoped memory for linear_regression_forward.1']
  %s0 = inlined_call_operand.vmem [shape: f32[1,512], index: 0, kind: input, shape index: {}]
  %s1 = inlined_call_operand.vmem [shape: f32[1024,1], index: 1, kind: input, shape index: {}]
  %s2 = inlined_call_operand.vmem [shape: f32[1024,1], index: 2, kind: input, shape index: {}]
  %s3 = inlined_call_operand.vmem [shape: f32[8,1024], index: 3, kind: input, shape index: {}]
  %s4 = inlined_call_operand.<no memory space> [shape: f32[1], index: 4, kind: input, shape index: {}]
  %s5 = inlined_call_operand.vmem [shape: f32[1,512], index: 5, kind: output, shape index: {}]
  %s6 = sld [smem:[#allocation0]]
  $region53: #{linear_regression_forward.1} parent=0
    _
  %s8 = ssub.s32 1, %s6
  %s9 = scalar_select 0, %s8, %s6
  %10 = sst [smem:[#allocation2]] %s4
  loop: start=0, step=1, limit=4
  $region2: #{linear_regression_forward.1} parent=0 // loop_pre_header
    _
  $region3: #{linear_regression_forward.1} parent=0 // loop_header
    %s12 = sphi 0, %s16
    %p13 = scmp.ge.s32.totalorder %s12, 4
    %s22 = sphi 0, %s24
    %s25 = sphi 0, %s22
    %s26 = sphi 0, %s25
    %s42 = sphi 0, %s26
    %s46 = sphi 0, %s46
    %s48 = sphi 0, %s46
    %s49 = sphi 0, %s48
    %s63 = sphi 0, %s49
    %s67 = sphi 0, %s67
    %s69 = sphi 0, %s67
    %s70 = sphi 0, %s69
    %s84 = sphi 0, %s70
    %s88 = sphi 0, %s88
    %s90 = sphi 0, %s88
    %s91 = sphi 0, %s90
    %s105 = sphi 0, %s91
    %s109 = sphi 0, %s109
    %s111 = sphi 0, %s109
    %s112 = sphi 0, %s111
    %s126 = sphi 0, %s112
    %s132 = sphi 0, %s134
    %s135 = sphi 0, %s132
    %s136 = sphi 0, %s135
    %s152 = sphi 0, %s136
  $region4: #{linear_regression_forward.1} parent=0 // loop_header_branch
    %15 = sbr.rel (%p13) target = $region8
  $region5: #{linear_regression_forward.1} parent=0 // loop_body
    %s17 = ssub.s32 %s12, 1
    %s18 = ssub.s32 %s12, 2
    %s19 = sadd.s32 %s12, 1
    %s20 = ssub.s32 %s12, %s19
    %p21 = scmp.eq.s32.totalorder %s20, 0
    %s23 = sadd.s32 %s22, 1
    %s24 = scalar_select %p21, %s22, %s23
    %p27 = pneg %p21
    %p28 = scmp.eq.s32.totalorder %s12, 1
    %p29 = por %p27, %p28
    %p30 = scmp.ne.s32.totalorder %s22, %s25
    %p31 = scmp.eq.s32.totalorder %s12, 0
    %p32 = por %p30, %p31
    %p33 = scmp.ne.s32.totalorder %s22, %s25
    %p34 = scmp.eq.s32.totalorder %s17, 1
    %p35 = por %p33, %p34
    %p36 = scmp.ne.s32.totalorder %s25, %s26
    %p37 = scmp.eq.s32.totalorder %s17, 0
    %p38 = por %p36, %p37
    %p39 = scmp.ne.s32.totalorder %s25, %s26
    %p40 = scmp.eq.s32.totalorder %s18, 1
    %p41 = por %p39, %p40
    %p43 = scmp.ne.s32.totalorder %s26, %s42
    %p44 = scmp.eq.s32.totalorder %s18, 0
    %p45 = por %p43, %p44
    %s47 = sadd.s32 %s46, 1
    %p50 = scmp.eq.s32.totalorder %s12, 1
    %p51 = scmp.ne.s32.totalorder %s46, %s48
    %p52 = scmp.eq.s32.totalorder %s12, 0
    %p53 = por %p51, %p52
    %p54 = scmp.ne.s32.totalorder %s46, %s48
    %p55 = scmp.eq.s32.totalorder %s17, 1
    %p56 = por %p54, %p55
    %p57 = scmp.ne.s32.totalorder %s48, %s49
    %p58 = scmp.eq.s32.totalorder %s17, 0
    %p59 = por %p57, %p58
    %p60 = scmp.ne.s32.totalorder %s48, %s49
    %p61 = scmp.eq.s32.totalorder %s18, 1
    %p62 = por %p60, %p61
    %p64 = scmp.ne.s32.totalorder %s49, %s63
    %p65 = scmp.eq.s32.totalorder %s18, 0
    %p66 = por %p64, %p65
    %s68 = sadd.s32 %s67, 1
    %p71 = scmp.eq.s32.totalorder %s12, 1
    %p72 = scmp.ne.s32.totalorder %s67, %s69
    %p73 = scmp.eq.s32.totalorder %s12, 0
    %p74 = por %p72, %p73
    %p75 = scmp.ne.s32.totalorder %s67, %s69
    %p76 = scmp.eq.s32.totalorder %s17, 1
    %p77 = por %p75, %p76
    %p78 = scmp.ne.s32.totalorder %s69, %s70
    %p79 = scmp.eq.s32.totalorder %s17, 0
    %p80 = por %p78, %p79
    %p81 = scmp.ne.s32.totalorder %s69, %s70
    %p82 = scmp.eq.s32.totalorder %s18, 1
    %p83 = por %p81, %p82
    %p85 = scmp.ne.s32.totalorder %s70, %s84
    %p86 = scmp.eq.s32.totalorder %s18, 0
    %p87 = por %p85, %p86
    %s89 = sadd.s32 %s88, 1
    %p92 = scmp.eq.s32.totalorder %s12, 1
    %p93 = scmp.ne.s32.totalorder %s88, %s90
    %p94 = scmp.eq.s32.totalorder %s12, 0
    %p95 = por %p93, %p94
    %p96 = scmp.ne.s32.totalorder %s88, %s90
    %p97 = scmp.eq.s32.totalorder %s17, 1
    %p98 = por %p96, %p97
    %p99 = scmp.ne.s32.totalorder %s90, %s91
    %p100 = scmp.eq.s32.totalorder %s17, 0
    %p101 = por %p99, %p100
    %p102 = scmp.ne.s32.totalorder %s90, %s91
    %p103 = scmp.eq.s32.totalorder %s18, 1
    %p104 = por %p102, %p103
    %p106 = scmp.ne.s32.totalorder %s91, %s105
    %p107 = scmp.eq.s32.totalorder %s18, 0
    %p108 = por %p106, %p107
    %s110 = sadd.s32 %s109, 1
    %p113 = scmp.eq.s32.totalorder %s12, 1
    %p114 = scmp.ne.s32.totalorder %s109, %s111
    %p115 = scmp.eq.s32.totalorder %s12, 0
    %p116 = por %p114, %p115
    %p117 = scmp.ne.s32.totalorder %s109, %s111
    %p118 = scmp.eq.s32.totalorder %s17, 1
    %p119 = por %p117, %p118
    %p120 = scmp.ne.s32.totalorder %s111, %s112
    %p121 = scmp.eq.s32.totalorder %s17, 0
    %p122 = por %p120, %p121
    %p123 = scmp.ne.s32.totalorder %s111, %s112
    %p124 = scmp.eq.s32.totalorder %s18, 1
    %p125 = por %p123, %p124
    %p127 = scmp.ne.s32.totalorder %s112, %s126
    %p128 = scmp.eq.s32.totalorder %s18, 0
    %p129 = por %p127, %p128
    %s130 = ssub.s32 %s12, %s19
    %p131 = scmp.eq.s32.totalorder %s130, 0
    %s133 = sadd.s32 %s132, 1
    %s134 = scalar_select %p131, %s132, %s133
    %p137 = pneg %p131
    %p138 = scmp.eq.s32.totalorder %s12, 1
    %p139 = por %p137, %p138
    %p140 = scmp.ne.s32.totalorder %s132, %s135
    %p141 = scmp.eq.s32.totalorder %s12, 0
    %p142 = por %p140, %p141
    %p143 = scmp.ne.s32.totalorder %s132, %s135
    %p144 = scmp.eq.s32.totalorder %s17, 1
    %p145 = por %p143, %p144
    %p146 = scmp.ne.s32.totalorder %s135, %s136
    %p147 = scmp.eq.s32.totalorder %s17, 0
    %p148 = por %p146, %p147
    %p149 = scmp.ne.s32.totalorder %s135, %s136
    %p150 = scmp.eq.s32.totalorder %s18, 1
    %p151 = por %p149, %p150
    %p153 = scmp.ne.s32.totalorder %s136, %s152
    %p154 = scmp.eq.s32.totalorder %s18, 0
    %p155 = por %p153, %p154
    %p156 = scmp.le.s32.totalorder 1, %s12
    %p157 = scmp.lt.s32.totalorder %s12, 3
    %p158 = pnand %p156, %p157
    %p159 = pneg %p158
    // Predicated region
    $region9: #{linear_regression_forward.1} parent=5 // pred_check
      _
    $region10: #{linear_regression_forward.1} parent=5 // pred_check_branch
      %161 = sbr.rel (%p158) target = $region12
    $region11: #{linear_regression_forward.1} parent=5 // pred_region
      %s162 = ssub.s32 %s12, 1
      // Predicated region
      $region13: #{linear_regression_forward.1} parent=11 // pred_check
        %p163 = pneg %p59
      $region14: #{linear_regression_forward.1} parent=11 // pred_check_branch
        %165 = sbr.rel (%p163) target = $region16
      $region15: #{linear_regression_forward.1} parent=11 // pred_region
        _
      $region16: #{linear_regression_forward.1} parent=11 // pred_fallthru
        _
      // Predicated region
      $region17: #{linear_regression_forward.1} parent=11 // pred_check
        %p166 = pneg %p80
      $region18: #{linear_regression_forward.1} parent=11 // pred_check_branch
        %168 = sbr.rel (%p166) target = $region20
      $region19: #{linear_regression_forward.1} parent=11 // pred_region
        _
      $region20: #{linear_regression_forward.1} parent=11 // pred_fallthru
        _
      // Predicated region
      $region21: #{linear_regression_forward.1} parent=11 // pred_check
        %p169 = pneg %p101
      $region22: #{linear_regression_forward.1} parent=11 // pred_check_branch
        %171 = sbr.rel (%p169) target = $region24
      $region23: #{linear_regression_forward.1} parent=11 // pred_region
        _
      $region24: #{linear_regression_forward.1} parent=11 // pred_fallthru
        _
      // Predicated region
      $region25: #{linear_regression_forward.1} parent=11 // pred_check
        %p172 = pneg %p122
      $region26: #{linear_regression_forward.1} parent=11 // pred_check_branch
        %174 = sbr.rel (%p172) target = $region28
      $region27: #{linear_regression_forward.1} parent=11 // pred_region
        _
      $region28: #{linear_regression_forward.1} parent=11 // pred_fallthru
        _
    $region12: #{linear_regression_forward.1} parent=5 // pred_fallthru
      _
    %p175 = scmp.lt.s32.totalorder %s12, 2
    // Predicated region
    $region29: #{linear_regression_forward.1} parent=5 // pred_check
      %p176 = pneg %p175
    $region30: #{linear_regression_forward.1} parent=5 // pred_check_branch
      %178 = sbr.rel (%p176) target = $region32
    $region31: #{linear_regression_forward.1} parent=5 // pred_region
      // Predicated region
      $region33: #{linear_regression_forward.1} parent=31 // pred_check
        %p179 = pneg %p32
      $region34: #{linear_regression_forward.1} parent=31 // pred_check_branch
        %181 = sbr.rel (%p179) target = $region36
      $region35: #{linear_regression_forward.1} parent=31 // pred_region
        %s182 = smul.u32 2, %s12
        %p183 = scmp.lt.s32.totalorder %s182, 3
        %s184 = scalar_select %p183, %s182, 3
        %s185 = scalar_lea.vmem %s0, %s184
        %s186 = smul.u32 2, %s12
      $region36: #{linear_regression_forward.1} parent=31 // pred_fallthru
        _
    $region32: #{linear_regression_forward.1} parent=5 // pred_fallthru
      _
    %p187 = scmp.le.s32.totalorder 1, %s12
    %p188 = scmp.lt.s32.totalorder %s12, 3
    %p189 = pnand %p187, %p188
    %p190 = pneg %p189
    // Predicated region
    $region37: #{linear_regression_forward.1} parent=5 // pred_check
      _
    $region38: #{linear_regression_forward.1} parent=5 // pred_check_branch
      %192 = sbr.rel (%p189) target = $region40
    $region39: #{linear_regression_forward.1} parent=5 // pred_region
      %s193 = ssub.s32 %s12, 1
      %s194 = smul.u32 2, %s17
      %p195 = scmp.lt.s32.totalorder %s194, 3
      %s196 = scalar_select %p195, %s194, 3
      %s197 = scalar_lea.vmem %s0, %s196
      %p198 = pneg %p38
      %p199 = pneg %p35
      %p200 = pneg %p59
      %p201 = pneg %p56
      %p202 = pneg %p80
      %p203 = pneg %p77
      %p204 = pneg %p101
      %p205 = pneg %p98
      %p206 = pneg %p122
      %p207 = pneg %p119
      %p208 = pneg %p148
      %p209 = pneg %p145
      %s210 = smul.u32 2, %s17
      %p211 = scmp.lt.s32.totalorder %s210, 3
      %s212 = scalar_select %p211, %s210, 3
      %s213 = scalar_lea.vmem %s5, %s212
      %s214 = smul.u32 2, %s17
      %p215 = scmp.lt.s32.totalorder %s214, 3
      %s216 = scalar_select %p215, %s214, 3
      %s217 = scalar_lea.vmem %s0, %s216
      %s218 = smul.u32 2, %s17
      %s219 = smul.u32 2, %s17
      %p220 = scmp.lt.s32.totalorder %s219, 3
      %s221 = scalar_select %p220, %s219, 3
      %s222 = scalar_lea.vmem %s5, %s221
      %s223 = smul.u32 2, %s17
      %v224 = vld [vmem:[%s217] sm:$0x3]
      %v225 = vld [vmem:[%s1] sm:$0xff]
      %v226 = vld [vmem:[%s1 + $0x8] sm:$0xff]
      %v227 = vld [vmem:[%s1 + $0x10] sm:$0xff]
      %v228 = vld [vmem:[%s1 + $0x18] sm:$0xff]
      %v229 = vld [vmem:[%s1 + $0x20] sm:$0xff]
      %v230 = vld [vmem:[%s1 + $0x28] sm:$0xff]
      %v231 = vld [vmem:[%s1 + $0x30] sm:$0xff]
      %v232 = vld [vmem:[%s1 + $0x38] sm:$0xff]
      %v233 = vld [vmem:[%s1 + $0x40] sm:$0xff]
      %v234 = vld [vmem:[%s1 + $0x48] sm:$0xff]
      %v235 = vld [vmem:[%s1 + $0x50] sm:$0xff]
      %v236 = vld [vmem:[%s1 + $0x58] sm:$0xff]
      %v237 = vld [vmem:[%s1 + $0x60] sm:$0xff]
      %v238 = vld [vmem:[%s1 + $0x68] sm:$0xff]
      %v239 = vld [vmem:[%s1 + $0x70] sm:$0xff]
      %v240 = vld [vmem:[%s1 + $0x78] sm:$0xff]
      %v241 = vld [vmem:[%s1 + $0x80] sm:$0xff]
      %v242 = vld [vmem:[%s1 + $0x88] sm:$0xff]
      %v243 = vld [vmem:[%s1 + $0x90] sm:$0xff]
      %v244 = vld [vmem:[%s1 + $0x98] sm:$0xff]
      %v245 = vld [vmem:[%s1 + $0xa0] sm:$0xff]
      %v246 = vld [vmem:[%s1 + $0xa8] sm:$0xff]
      %v247 = vld [vmem:[%s1 + $0xb0] sm:$0xff]
      %v248 = vld [vmem:[%s1 + $0xb8] sm:$0xff]
      %v249 = vld [vmem:[%s1 + $0xc0] sm:$0xff]
      %v250 = vld [vmem:[%s1 + $0xc8] sm:$0xff]
      %v251 = vld [vmem:[%s1 + $0xd0] sm:$0xff]
      %v252 = vld [vmem:[%s1 + $0xd8] sm:$0xff]
      %v253 = vld [vmem:[%s1 + $0xe0] sm:$0xff]
      %v254 = vld [vmem:[%s1 + $0xe8] sm:$0xff]
      %v255 = vld [vmem:[%s1 + $0xf0] sm:$0xff]
      %v256 = vld [vmem:[%s1 + $0xf8] sm:$0xff]
      %v257 = vld [vmem:[%s2] sm:$0xff]
      %v258 = vld [vmem:[%s2 + $0x8] sm:$0xff]
      %v259 = vld [vmem:[%s2 + $0x10] sm:$0xff]
      %v260 = vld [vmem:[%s2 + $0x18] sm:$0xff]
      %v261 = vld [vmem:[%s2 + $0x20] sm:$0xff]
      %v262 = vld [vmem:[%s2 + $0x28] sm:$0xff]
      %v263 = vld [vmem:[%s2 + $0x30] sm:$0xff]
      %v264 = vld [vmem:[%s2 + $0x38] sm:$0xff]
      %v265 = vld [vmem:[%s2 + $0x40] sm:$0xff]
      %v266 = vld [vmem:[%s2 + $0x48] sm:$0xff]
      %v267 = vld [vmem:[%s2 + $0x50] sm:$0xff]
      %v268 = vld [vmem:[%s2 + $0x58] sm:$0xff]
      %v269 = vld [vmem:[%s2 + $0x60] sm:$0xff]
      %v270 = vld [vmem:[%s2 + $0x68] sm:$0xff]
      %v271 = vld [vmem:[%s2 + $0x70] sm:$0xff]
      %v272 = vld [vmem:[%s2 + $0x78] sm:$0xff]
      %v273 = vld [vmem:[%s2 + $0x80] sm:$0xff]
      %v274 = vld [vmem:[%s2 + $0x88] sm:$0xff]
      %v275 = vld [vmem:[%s2 + $0x90] sm:$0xff]
      %v276 = vld [vmem:[%s2 + $0x98] sm:$0xff]
      %v277 = vld [vmem:[%s2 + $0xa0] sm:$0xff]
      %v278 = vld [vmem:[%s2 + $0xa8] sm:$0xff]
      %v279 = vld [vmem:[%s2 + $0xb0] sm:$0xff]
      %v280 = vld [vmem:[%s2 + $0xb8] sm:$0xff]
      %v281 = vld [vmem:[%s2 + $0xc0] sm:$0xff]
      %v282 = vld [vmem:[%s2 + $0xc8] sm:$0xff]
      %v283 = vld [vmem:[%s2 + $0xd0] sm:$0xff]
      %v284 = vld [vmem:[%s2 + $0xd8] sm:$0xff]
      %v285 = vld [vmem:[%s2 + $0xe0] sm:$0xff]
      %v286 = vld [vmem:[%s2 + $0xe8] sm:$0xff]
      %v287 = vld [vmem:[%s2 + $0xf0] sm:$0xff]
      %v288 = vld [vmem:[%s2 + $0xf8] sm:$0xff]
      %290 = vset.pattern.permute.xlu0 0
      %291 = vperm.xlu0 %290, %v225
      %v292 = vpop.permute.xlu0 %291
      %295 = vset.pattern.permute.xlu0 0
      %296 = vperm.xlu0 %295, %v226
      %v297 = vpop.permute.xlu0 %296
      %300 = vset.pattern.permute.xlu0 0
      %301 = vperm.xlu0 %300, %v227
      %v302 = vpop.permute.xlu0 %301
      %305 = vset.pattern.permute.xlu0 0
      %306 = vperm.xlu0 %305, %v228
      %v307 = vpop.permute.xlu0 %306
      %310 = vset.pattern.permute.xlu0 0
      %311 = vperm.xlu0 %310, %v229
      %v312 = vpop.permute.xlu0 %311
      %315 = vset.pattern.permute.xlu0 0
      %316 = vperm.xlu0 %315, %v230
      %v317 = vpop.permute.xlu0 %316
      %320 = vset.pattern.permute.xlu0 0
      %321 = vperm.xlu0 %320, %v231
      %v322 = vpop.permute.xlu0 %321
      %325 = vset.pattern.permute.xlu0 0
      %326 = vperm.xlu0 %325, %v232
      %v327 = vpop.permute.xlu0 %326
      %330 = vset.pattern.permute.xlu0 0
      %331 = vperm.xlu0 %330, %v233
      %v332 = vpop.permute.xlu0 %331
      %335 = vset.pattern.permute.xlu0 0
      %336 = vperm.xlu0 %335, %v234
      %v337 = vpop.permute.xlu0 %336
      %340 = vset.pattern.permute.xlu0 0
      %341 = vperm.xlu0 %340, %v235
      %v342 = vpop.permute.xlu0 %341
      %345 = vset.pattern.permute.xlu0 0
      %346 = vperm.xlu0 %345, %v236
      %v347 = vpop.permute.xlu0 %346
      %350 = vset.pattern.permute.xlu0 0
      %351 = vperm.xlu0 %350, %v237
      %v352 = vpop.permute.xlu0 %351
      %355 = vset.pattern.permute.xlu0 0
      %356 = vperm.xlu0 %355, %v238
      %v357 = vpop.permute.xlu0 %356
      %360 = vset.pattern.permute.xlu0 0
      %361 = vperm.xlu0 %360, %v239
      %v362 = vpop.permute.xlu0 %361
      %365 = vset.pattern.permute.xlu0 0
      %366 = vperm.xlu0 %365, %v240
      %v367 = vpop.permute.xlu0 %366
      %370 = vset.pattern.permute.xlu0 0
      %371 = vperm.xlu0 %370, %v241
      %v372 = vpop.permute.xlu0 %371
      %375 = vset.pattern.permute.xlu0 0
      %376 = vperm.xlu0 %375, %v242
      %v377 = vpop.permute.xlu0 %376
      %380 = vset.pattern.permute.xlu0 0
      %381 = vperm.xlu0 %380, %v243
      %v382 = vpop.permute.xlu0 %381
      %385 = vset.pattern.permute.xlu0 0
      %386 = vperm.xlu0 %385, %v244
      %v387 = vpop.permute.xlu0 %386
      %390 = vset.pattern.permute.xlu0 0
      %391 = vperm.xlu0 %390, %v245
      %v392 = vpop.permute.xlu0 %391
      %395 = vset.pattern.permute.xlu0 0
      %396 = vperm.xlu0 %395, %v246
      %v397 = vpop.permute.xlu0 %396
      %400 = vset.pattern.permute.xlu0 0
      %401 = vperm.xlu0 %400, %v247
      %v402 = vpop.permute.xlu0 %401
      %405 = vset.pattern.permute.xlu0 0
      %406 = vperm.xlu0 %405, %v248
      %v407 = vpop.permute.xlu0 %406
      %410 = vset.pattern.permute.xlu0 0
      %411 = vperm.xlu0 %410, %v249
      %v412 = vpop.permute.xlu0 %411
      %415 = vset.pattern.permute.xlu0 0
      %416 = vperm.xlu0 %415, %v250
      %v417 = vpop.permute.xlu0 %416
      %420 = vset.pattern.permute.xlu0 0
      %421 = vperm.xlu0 %420, %v251
      %v422 = vpop.permute.xlu0 %421
      %425 = vset.pattern.permute.xlu0 0
      %426 = vperm.xlu0 %425, %v252
      %v427 = vpop.permute.xlu0 %426
      %430 = vset.pattern.permute.xlu0 0
      %431 = vperm.xlu0 %430, %v253
      %v432 = vpop.permute.xlu0 %431
      %435 = vset.pattern.permute.xlu0 0
      %436 = vperm.xlu0 %435, %v254
      %v437 = vpop.permute.xlu0 %436
      %440 = vset.pattern.permute.xlu0 0
      %441 = vperm.xlu0 %440, %v255
      %v442 = vpop.permute.xlu0 %441
      %445 = vset.pattern.permute.xlu0 0
      %446 = vperm.xlu0 %445, %v256
      %v447 = vpop.permute.xlu0 %446
      %v450 = vlaneseq
      %v451 = vshrl.u32 %v450, 7
      %v452 = vsub.s32 0, %v451
      %v453 = vrot.slane %v224, %v452
      %v454 = vlaneseq
      %v455 = vshrl.u32 %v454, 7
      %v456 = vsub.s32 1, %v455
      %v457 = vrot.slane %v224, %v456
      %v460 = vmul.f32 %v292, %v453
      %v461 = vmul.f32 %v292, %v457
      %v462 = vmul.f32 %v297, %v453
      %v463 = vmul.f32 %v297, %v457
      %v464 = vmul.f32 %v302, %v453
      %v465 = vmul.f32 %v302, %v457
      %v466 = vmul.f32 %v307, %v453
      %v467 = vmul.f32 %v307, %v457
      %v468 = vmul.f32 %v312, %v453
      %v469 = vmul.f32 %v312, %v457
      %v470 = vmul.f32 %v317, %v453
      %v471 = vmul.f32 %v317, %v457
      %v472 = vmul.f32 %v322, %v453
      %v473 = vmul.f32 %v322, %v457
      %v474 = vmul.f32 %v327, %v453
      %v475 = vmul.f32 %v327, %v457
      %v476 = vmul.f32 %v332, %v453
      %v477 = vmul.f32 %v332, %v457
      %v478 = vmul.f32 %v337, %v453
      %v479 = vmul.f32 %v337, %v457
      %v480 = vmul.f32 %v342, %v453
      %v481 = vmul.f32 %v342, %v457
      %v482 = vmul.f32 %v347, %v453
      %v483 = vmul.f32 %v347, %v457
      %v484 = vmul.f32 %v352, %v453
      %v485 = vmul.f32 %v352, %v457
      %v486 = vmul.f32 %v357, %v453
      %v487 = vmul.f32 %v357, %v457
      %v488 = vmul.f32 %v362, %v453
      %v489 = vmul.f32 %v362, %v457
      %v490 = vmul.f32 %v367, %v453
      %v491 = vmul.f32 %v367, %v457
      %v492 = vmul.f32 %v372, %v453
      %v493 = vmul.f32 %v372, %v457
      %v494 = vmul.f32 %v377, %v453
      %v495 = vmul.f32 %v377, %v457
      %v496 = vmul.f32 %v382, %v453
      %v497 = vmul.f32 %v382, %v457
      %v498 = vmul.f32 %v387, %v453
      %v499 = vmul.f32 %v387, %v457
      %v500 = vmul.f32 %v392, %v453
      %v501 = vmul.f32 %v392, %v457
      %v502 = vmul.f32 %v397, %v453
      %v503 = vmul.f32 %v397, %v457
      %v504 = vmul.f32 %v402, %v453
      %v505 = vmul.f32 %v402, %v457
      %v506 = vmul.f32 %v407, %v453
      %v507 = vmul.f32 %v407, %v457
      %v508 = vmul.f32 %v412, %v453
      %v509 = vmul.f32 %v412, %v457
      %v510 = vmul.f32 %v417, %v453
      %v511 = vmul.f32 %v417, %v457
      %v512 = vmul.f32 %v422, %v453
      %v513 = vmul.f32 %v422, %v457
      %v514 = vmul.f32 %v427, %v453
      %v515 = vmul.f32 %v427, %v457
      %v516 = vmul.f32 %v432, %v453
      %v517 = vmul.f32 %v432, %v457
      %v518 = vmul.f32 %v437, %v453
      %v519 = vmul.f32 %v437, %v457
      %v520 = vmul.f32 %v442, %v453
      %v521 = vmul.f32 %v442, %v457
      %v522 = vmul.f32 %v447, %v453
      %v523 = vmul.f32 %v447, %v457
      %525 = vset.pattern.permute.xlu0 0
      %526 = vperm.xlu0 %525, %v257
      %v527 = vpop.permute.xlu0 %526
      %530 = vset.pattern.permute.xlu0 0
      %531 = vperm.xlu0 %530, %v258
      %v532 = vpop.permute.xlu0 %531
      %535 = vset.pattern.permute.xlu0 0
      %536 = vperm.xlu0 %535, %v259
      %v537 = vpop.permute.xlu0 %536
      %540 = vset.pattern.permute.xlu0 0
      %541 = vperm.xlu0 %540, %v260
      %v542 = vpop.permute.xlu0 %541
      %545 = vset.pattern.permute.xlu0 0
      %546 = vperm.xlu0 %545, %v261
      %v547 = vpop.permute.xlu0 %546
      %550 = vset.pattern.permute.xlu0 0
      %551 = vperm.xlu0 %550, %v262
      %v552 = vpop.permute.xlu0 %551
      %555 = vset.pattern.permute.xlu0 0
      %556 = vperm.xlu0 %555, %v263
      %v557 = vpop.permute.xlu0 %556
      %560 = vset.pattern.permute.xlu0 0
      %561 = vperm.xlu0 %560, %v264
      %v562 = vpop.permute.xlu0 %561
      %565 = vset.pattern.permute.xlu0 0
      %566 = vperm.xlu0 %565, %v265
      %v567 = vpop.permute.xlu0 %566
      %570 = vset.pattern.permute.xlu0 0
      %571 = vperm.xlu0 %570, %v266
      %v572 = vpop.permute.xlu0 %571
      %575 = vset.pattern.permute.xlu0 0
      %576 = vperm.xlu0 %575, %v267
      %v577 = vpop.permute.xlu0 %576
      %580 = vset.pattern.permute.xlu0 0
      %581 = vperm.xlu0 %580, %v268
      %v582 = vpop.permute.xlu0 %581
      %585 = vset.pattern.permute.xlu0 0
      %586 = vperm.xlu0 %585, %v269
      %v587 = vpop.permute.xlu0 %586
      %590 = vset.pattern.permute.xlu0 0
      %591 = vperm.xlu0 %590, %v270
      %v592 = vpop.permute.xlu0 %591
      %595 = vset.pattern.permute.xlu0 0
      %596 = vperm.xlu0 %595, %v271
      %v597 = vpop.permute.xlu0 %596
      %600 = vset.pattern.permute.xlu0 0
      %601 = vperm.xlu0 %600, %v272
      %v602 = vpop.permute.xlu0 %601
      %605 = vset.pattern.permute.xlu0 0
      %606 = vperm.xlu0 %605, %v273
      %v607 = vpop.permute.xlu0 %606
      %610 = vset.pattern.permute.xlu0 0
      %611 = vperm.xlu0 %610, %v274
      %v612 = vpop.permute.xlu0 %611
      %615 = vset.pattern.permute.xlu0 0
      %616 = vperm.xlu0 %615, %v275
      %v617 = vpop.permute.xlu0 %616
      %620 = vset.pattern.permute.xlu0 0
      %621 = vperm.xlu0 %620, %v276
      %v622 = vpop.permute.xlu0 %621
      %625 = vset.pattern.permute.xlu0 0
      %626 = vperm.xlu0 %625, %v277
      %v627 = vpop.permute.xlu0 %626
      %630 = vset.pattern.permute.xlu0 0
      %631 = vperm.xlu0 %630, %v278
      %v632 = vpop.permute.xlu0 %631
      %635 = vset.pattern.permute.xlu0 0
      %636 = vperm.xlu0 %635, %v279
      %v637 = vpop.permute.xlu0 %636
      %640 = vset.pattern.permute.xlu0 0
      %641 = vperm.xlu0 %640, %v280
      %v642 = vpop.permute.xlu0 %641
      %645 = vset.pattern.permute.xlu0 0
      %646 = vperm.xlu0 %645, %v281
      %v647 = vpop.permute.xlu0 %646
      %650 = vset.pattern.permute.xlu0 0
      %651 = vperm.xlu0 %650, %v282
      %v652 = vpop.permute.xlu0 %651
      %655 = vset.pattern.permute.xlu0 0
      %656 = vperm.xlu0 %655, %v283
      %v657 = vpop.permute.xlu0 %656
      %660 = vset.pattern.permute.xlu0 0
      %661 = vperm.xlu0 %660, %v284
      %v662 = vpop.permute.xlu0 %661
      %665 = vset.pattern.permute.xlu0 0
      %666 = vperm.xlu0 %665, %v285
      %v667 = vpop.permute.xlu0 %666
      %670 = vset.pattern.permute.xlu0 0
      %671 = vperm.xlu0 %670, %v286
      %v672 = vpop.permute.xlu0 %671
      %675 = vset.pattern.permute.xlu0 0
      %676 = vperm.xlu0 %675, %v287
      %v677 = vpop.permute.xlu0 %676
      %680 = vset.pattern.permute.xlu0 0
      %681 = vperm.xlu0 %680, %v288
      %v682 = vpop.permute.xlu0 %681
      %v684 = vadd.f32 %v460, %v527
      %v685 = vadd.f32 %v461, %v527
      %v686 = vadd.f32 %v462, %v532
      %v687 = vadd.f32 %v463, %v532
      %v688 = vadd.f32 %v464, %v537
      %v689 = vadd.f32 %v465, %v537
      %v690 = vadd.f32 %v466, %v542
      %v691 = vadd.f32 %v467, %v542
      %v692 = vadd.f32 %v468, %v547
      %v693 = vadd.f32 %v469, %v547
      %v694 = vadd.f32 %v470, %v552
      %v695 = vadd.f32 %v471, %v552
      %v696 = vadd.f32 %v472, %v557
      %v697 = vadd.f32 %v473, %v557
      %v698 = vadd.f32 %v474, %v562
      %v699 = vadd.f32 %v475, %v562
      %v700 = vadd.f32 %v476, %v567
      %v701 = vadd.f32 %v477, %v567
      %v702 = vadd.f32 %v478, %v572
      %v703 = vadd.f32 %v479, %v572
      %v704 = vadd.f32 %v480, %v577
      %v705 = vadd.f32 %v481, %v577
      %v706 = vadd.f32 %v482, %v582
      %v707 = vadd.f32 %v483, %v582
      %v708 = vadd.f32 %v484, %v587
      %v709 = vadd.f32 %v485, %v587
      %v710 = vadd.f32 %v486, %v592
      %v711 = vadd.f32 %v487, %v592
      %v712 = vadd.f32 %v488, %v597
      %v713 = vadd.f32 %v489, %v597
      %v714 = vadd.f32 %v490, %v602
      %v715 = vadd.f32 %v491, %v602
      %v716 = vadd.f32 %v492, %v607
      %v717 = vadd.f32 %v493, %v607
      %v718 = vadd.f32 %v494, %v612
      %v719 = vadd.f32 %v495, %v612
      %v720 = vadd.f32 %v496, %v617
      %v721 = vadd.f32 %v497, %v617
      %v722 = vadd.f32 %v498, %v622
      %v723 = vadd.f32 %v499, %v622
      %v724 = vadd.f32 %v500, %v627
      %v725 = vadd.f32 %v501, %v627
      %v726 = vadd.f32 %v502, %v632
      %v727 = vadd.f32 %v503, %v632
      %v728 = vadd.f32 %v504, %v637
      %v729 = vadd.f32 %v505, %v637
      %v730 = vadd.f32 %v506, %v642
      %v731 = vadd.f32 %v507, %v642
      %v732 = vadd.f32 %v508, %v647
      %v733 = vadd.f32 %v509, %v647
      %v734 = vadd.f32 %v510, %v652
      %v735 = vadd.f32 %v511, %v652
      %v736 = vadd.f32 %v512, %v657
      %v737 = vadd.f32 %v513, %v657
      %v738 = vadd.f32 %v514, %v662
      %v739 = vadd.f32 %v515, %v662
      %v740 = vadd.f32 %v516, %v667
      %v741 = vadd.f32 %v517, %v667
      %v742 = vadd.f32 %v518, %v672
      %v743 = vadd.f32 %v519, %v672
      %v744 = vadd.f32 %v520, %v677
      %v745 = vadd.f32 %v521, %v677
      %v746 = vadd.f32 %v522, %v682
      %v747 = vadd.f32 %v523, %v682
      %v748 = vmax.f32 %v684, 0.0
      %v749 = vmax.f32 %v685, 0.0
      %v750 = vmax.f32 %v686, 0.0
      %v751 = vmax.f32 %v687, 0.0
      %v752 = vmax.f32 %v688, 0.0
      %v753 = vmax.f32 %v689, 0.0
      %v754 = vmax.f32 %v690, 0.0
      %v755 = vmax.f32 %v691, 0.0
      %v756 = vmax.f32 %v692, 0.0
      %v757 = vmax.f32 %v693, 0.0
      %v758 = vmax.f32 %v694, 0.0
      %v759 = vmax.f32 %v695, 0.0
      %v760 = vmax.f32 %v696, 0.0
      %v761 = vmax.f32 %v697, 0.0
      %v762 = vmax.f32 %v698, 0.0
      %v763 = vmax.f32 %v699, 0.0
      %v764 = vmax.f32 %v700, 0.0
      %v765 = vmax.f32 %v701, 0.0
      %v766 = vmax.f32 %v702, 0.0
      %v767 = vmax.f32 %v703, 0.0
      %v768 = vmax.f32 %v704, 0.0
      %v769 = vmax.f32 %v705, 0.0
      %v770 = vmax.f32 %v706, 0.0
      %v771 = vmax.f32 %v707, 0.0
      %v772 = vmax.f32 %v708, 0.0
      %v773 = vmax.f32 %v709, 0.0
      %v774 = vmax.f32 %v710, 0.0
      %v775 = vmax.f32 %v711, 0.0
      %v776 = vmax.f32 %v712, 0.0
      %v777 = vmax.f32 %v713, 0.0
      %v778 = vmax.f32 %v714, 0.0
      %v779 = vmax.f32 %v715, 0.0
      %v780 = vmax.f32 %v716, 0.0
      %v781 = vmax.f32 %v717, 0.0
      %v782 = vmax.f32 %v718, 0.0
      %v783 = vmax.f32 %v719, 0.0
      %v784 = vmax.f32 %v720, 0.0
      %v785 = vmax.f32 %v721, 0.0
      %v786 = vmax.f32 %v722, 0.0
      %v787 = vmax.f32 %v723, 0.0
      %v788 = vmax.f32 %v724, 0.0
      %v789 = vmax.f32 %v725, 0.0
      %v790 = vmax.f32 %v726, 0.0
      %v791 = vmax.f32 %v727, 0.0
      %v792 = vmax.f32 %v728, 0.0
      %v793 = vmax.f32 %v729, 0.0
      %v794 = vmax.f32 %v730, 0.0
      %v795 = vmax.f32 %v731, 0.0
      %v796 = vmax.f32 %v732, 0.0
      %v797 = vmax.f32 %v733, 0.0
      %v798 = vmax.f32 %v734, 0.0
      %v799 = vmax.f32 %v735, 0.0
      %v800 = vmax.f32 %v736, 0.0
      %v801 = vmax.f32 %v737, 0.0
      %v802 = vmax.f32 %v738, 0.0
      %v803 = vmax.f32 %v739, 0.0
      %v804 = vmax.f32 %v740, 0.0
      %v805 = vmax.f32 %v741, 0.0
      %v806 = vmax.f32 %v742, 0.0
      %v807 = vmax.f32 %v743, 0.0
      %v808 = vmax.f32 %v744, 0.0
      %v809 = vmax.f32 %v745, 0.0
      %v810 = vmax.f32 %v746, 0.0
      %v811 = vmax.f32 %v747, 0.0
      %v812 = vld [vmem:[%s3] sm:$0xff]
      %v813 = vld [vmem:[%s3 + $0x8] sm:$0xff]
      %v814 = vld [vmem:[%s1 + $0x100] sm:$0xff]
      %v815 = vld [vmem:[%s1 + $0x108] sm:$0xff]
      %v816 = vld [vmem:[%s1 + $0x110] sm:$0xff]
      %v817 = vld [vmem:[%s1 + $0x118] sm:$0xff]
      %v818 = vld [vmem:[%s1 + $0x120] sm:$0xff]
      %v819 = vld [vmem:[%s1 + $0x128] sm:$0xff]
      %v820 = vld [vmem:[%s1 + $0x130] sm:$0xff]
      %v821 = vld [vmem:[%s1 + $0x138] sm:$0xff]
      %v822 = vld [vmem:[%s1 + $0x140] sm:$0xff]
      %v823 = vld [vmem:[%s1 + $0x148] sm:$0xff]
      %v824 = vld [vmem:[%s1 + $0x150] sm:$0xff]
      %v825 = vld [vmem:[%s1 + $0x158] sm:$0xff]
      %v826 = vld [vmem:[%s1 + $0x160] sm:$0xff]
      %v827 = vld [vmem:[%s1 + $0x168] sm:$0xff]
      %v828 = vld [vmem:[%s1 + $0x170] sm:$0xff]
      %v829 = vld [vmem:[%s1 + $0x178] sm:$0xff]
      %v830 = vld [vmem:[%s1 + $0x180] sm:$0xff]
      %v831 = vld [vmem:[%s1 + $0x188] sm:$0xff]
      %v832 = vld [vmem:[%s1 + $0x190] sm:$0xff]
      %v833 = vld [vmem:[%s1 + $0x198] sm:$0xff]
      %v834 = vld [vmem:[%s1 + $0x1a0] sm:$0xff]
      %v835 = vld [vmem:[%s1 + $0x1a8] sm:$0xff]
      %v836 = vld [vmem:[%s1 + $0x1b0] sm:$0xff]
      %v837 = vld [vmem:[%s1 + $0x1b8] sm:$0xff]
      %v838 = vld [vmem:[%s1 + $0x1c0] sm:$0xff]
      %v839 = vld [vmem:[%s1 + $0x1c8] sm:$0xff]
      %v840 = vld [vmem:[%s1 + $0x1d0] sm:$0xff]
      %v841 = vld [vmem:[%s1 + $0x1d8] sm:$0xff]
      %v842 = vld [vmem:[%s1 + $0x1e0] sm:$0xff]
      %v843 = vld [vmem:[%s1 + $0x1e8] sm:$0xff]
      %v844 = vld [vmem:[%s1 + $0x1f0] sm:$0xff]
      %v845 = vld [vmem:[%s1 + $0x1f8] sm:$0xff]
      %v846 = vld [vmem:[%s2 + $0x100] sm:$0xff]
      %v847 = vld [vmem:[%s2 + $0x108] sm:$0xff]
      %v848 = vld [vmem:[%s2 + $0x110] sm:$0xff]
      %v849 = vld [vmem:[%s2 + $0x118] sm:$0xff]
      %v850 = vld [vmem:[%s2 + $0x120] sm:$0xff]
      %v851 = vld [vmem:[%s2 + $0x128] sm:$0xff]
      %v852 = vld [vmem:[%s2 + $0x130] sm:$0xff]
      %v853 = vld [vmem:[%s2 + $0x138] sm:$0xff]
      %v854 = vld [vmem:[%s2 + $0x140] sm:$0xff]
      %v855 = vld [vmem:[%s2 + $0x148] sm:$0xff]
      %v856 = vld [vmem:[%s2 + $0x150] sm:$0xff]
      %v857 = vld [vmem:[%s2 + $0x158] sm:$0xff]
      %v858 = vld [vmem:[%s2 + $0x160] sm:$0xff]
      %v859 = vld [vmem:[%s2 + $0x168] sm:$0xff]
      %v860 = vld [vmem:[%s2 + $0x170] sm:$0xff]
      %v861 = vld [vmem:[%s2 + $0x178] sm:$0xff]
      %v862 = vld [vmem:[%s2 + $0x180] sm:$0xff]
      %v863 = vld [vmem:[%s2 + $0x188] sm:$0xff]
      %v864 = vld [vmem:[%s2 + $0x190] sm:$0xff]
      %v865 = vld [vmem:[%s2 + $0x198] sm:$0xff]
      %v866 = vld [vmem:[%s2 + $0x1a0] sm:$0xff]
      %v867 = vld [vmem:[%s2 + $0x1a8] sm:$0xff]
      %v868 = vld [vmem:[%s2 + $0x1b0] sm:$0xff]
      %v869 = vld [vmem:[%s2 + $0x1b8] sm:$0xff]
      %v870 = vld [vmem:[%s2 + $0x1c0] sm:$0xff]
      %v871 = vld [vmem:[%s2 + $0x1c8] sm:$0xff]
      %v872 = vld [vmem:[%s2 + $0x1d0] sm:$0xff]
      %v873 = vld [vmem:[%s2 + $0x1d8] sm:$0xff]
      %v874 = vld [vmem:[%s2 + $0x1e0] sm:$0xff]
      %v875 = vld [vmem:[%s2 + $0x1e8] sm:$0xff]
      %v876 = vld [vmem:[%s2 + $0x1f0] sm:$0xff]
      %v877 = vld [vmem:[%s2 + $0x1f8] sm:$0xff]
      %879 = vset.pattern.permute.xlu0 0
      %880 = vperm.xlu0 %879, %v814
      %v881 = vpop.permute.xlu0 %880
      %884 = vset.pattern.permute.xlu0 0
      %885 = vperm.xlu0 %884, %v815
      %v886 = vpop.permute.xlu0 %885
      %889 = vset.pattern.permute.xlu0 0
      %890 = vperm.xlu0 %889, %v816
      %v891 = vpop.permute.xlu0 %890
      %894 = vset.pattern.permute.xlu0 0
      %895 = vperm.xlu0 %894, %v817
      %v896 = vpop.permute.xlu0 %895
      %899 = vset.pattern.permute.xlu0 0
      %900 = vperm.xlu0 %899, %v818
      %v901 = vpop.permute.xlu0 %900
      %904 = vset.pattern.permute.xlu0 0
      %905 = vperm.xlu0 %904, %v819
      %v906 = vpop.permute.xlu0 %905
      %909 = vset.pattern.permute.xlu0 0
      %910 = vperm.xlu0 %909, %v820
      %v911 = vpop.permute.xlu0 %910
      %914 = vset.pattern.permute.xlu0 0
      %915 = vperm.xlu0 %914, %v821
      %v916 = vpop.permute.xlu0 %915
      %919 = vset.pattern.permute.xlu0 0
      %920 = vperm.xlu0 %919, %v822
      %v921 = vpop.permute.xlu0 %920
      %924 = vset.pattern.permute.xlu0 0
      %925 = vperm.xlu0 %924, %v823
      %v926 = vpop.permute.xlu0 %925
      %929 = vset.pattern.permute.xlu0 0
      %930 = vperm.xlu0 %929, %v824
      %v931 = vpop.permute.xlu0 %930
      %934 = vset.pattern.permute.xlu0 0
      %935 = vperm.xlu0 %934, %v825
      %v936 = vpop.permute.xlu0 %935
      %939 = vset.pattern.permute.xlu0 0
      %940 = vperm.xlu0 %939, %v826
      %v941 = vpop.permute.xlu0 %940
      %944 = vset.pattern.permute.xlu0 0
      %945 = vperm.xlu0 %944, %v827
      %v946 = vpop.permute.xlu0 %945
      %949 = vset.pattern.permute.xlu0 0
      %950 = vperm.xlu0 %949, %v828
      %v951 = vpop.permute.xlu0 %950
      %954 = vset.pattern.permute.xlu0 0
      %955 = vperm.xlu0 %954, %v829
      %v956 = vpop.permute.xlu0 %955
      %959 = vset.pattern.permute.xlu0 0
      %960 = vperm.xlu0 %959, %v830
      %v961 = vpop.permute.xlu0 %960
      %964 = vset.pattern.permute.xlu0 0
      %965 = vperm.xlu0 %964, %v831
      %v966 = vpop.permute.xlu0 %965
      %969 = vset.pattern.permute.xlu0 0
      %970 = vperm.xlu0 %969, %v832
      %v971 = vpop.permute.xlu0 %970
      %974 = vset.pattern.permute.xlu0 0
      %975 = vperm.xlu0 %974, %v833
      %v976 = vpop.permute.xlu0 %975
      %979 = vset.pattern.permute.xlu0 0
      %980 = vperm.xlu0 %979, %v834
      %v981 = vpop.permute.xlu0 %980
      %984 = vset.pattern.permute.xlu0 0
      %985 = vperm.xlu0 %984, %v835
      %v986 = vpop.permute.xlu0 %985
      %989 = vset.pattern.permute.xlu0 0
      %990 = vperm.xlu0 %989, %v836
      %v991 = vpop.permute.xlu0 %990
      %994 = vset.pattern.permute.xlu0 0
      %995 = vperm.xlu0 %994, %v837
      %v996 = vpop.permute.xlu0 %995
      %999 = vset.pattern.permute.xlu0 0
      %1000 = vperm.xlu0 %999, %v838
      %v1001 = vpop.permute.xlu0 %1000
      %1004 = vset.pattern.permute.xlu0 0
      %1005 = vperm.xlu0 %1004, %v839
      %v1006 = vpop.permute.xlu0 %1005
      %1009 = vset.pattern.permute.xlu0 0
      %1010 = vperm.xlu0 %1009, %v840
      %v1011 = vpop.permute.xlu0 %1010
      %1014 = vset.pattern.permute.xlu0 0
      %1015 = vperm.xlu0 %1014, %v841
      %v1016 = vpop.permute.xlu0 %1015
      %1019 = vset.pattern.permute.xlu0 0
      %1020 = vperm.xlu0 %1019, %v842
      %v1021 = vpop.permute.xlu0 %1020
      %1024 = vset.pattern.permute.xlu0 0
      %1025 = vperm.xlu0 %1024, %v843
      %v1026 = vpop.permute.xlu0 %1025
      %1029 = vset.pattern.permute.xlu0 0
      %1030 = vperm.xlu0 %1029, %v844
      %v1031 = vpop.permute.xlu0 %1030
      %1034 = vset.pattern.permute.xlu0 0
      %1035 = vperm.xlu0 %1034, %v845
      %v1036 = vpop.permute.xlu0 %1035
      %v1038 = vmul.f32 %v881, %v453
      %v1039 = vmul.f32 %v881, %v457
      %v1040 = vmul.f32 %v886, %v453
      %v1041 = vmul.f32 %v886, %v457
      %v1042 = vmul.f32 %v891, %v453
      %v1043 = vmul.f32 %v891, %v457
      %v1044 = vmul.f32 %v896, %v453
      %v1045 = vmul.f32 %v896, %v457
      %v1046 = vmul.f32 %v901, %v453
      %v1047 = vmul.f32 %v901, %v457
      %v1048 = vmul.f32 %v906, %v453
      %v1049 = vmul.f32 %v906, %v457
      %v1050 = vmul.f32 %v911, %v453
      %v1051 = vmul.f32 %v911, %v457
      %v1052 = vmul.f32 %v916, %v453
      %v1053 = vmul.f32 %v916, %v457
      %v1054 = vmul.f32 %v921, %v453
      %v1055 = vmul.f32 %v921, %v457
      %v1056 = vmul.f32 %v926, %v453
      %v1057 = vmul.f32 %v926, %v457
      %v1058 = vmul.f32 %v931, %v453
      %v1059 = vmul.f32 %v931, %v457
      %v1060 = vmul.f32 %v936, %v453
      %v1061 = vmul.f32 %v936, %v457
      %v1062 = vmul.f32 %v941, %v453
      %v1063 = vmul.f32 %v941, %v457
      %v1064 = vmul.f32 %v946, %v453
      %v1065 = vmul.f32 %v946, %v457
      %v1066 = vmul.f32 %v951, %v453
      %v1067 = vmul.f32 %v951, %v457
      %v1068 = vmul.f32 %v956, %v453
      %v1069 = vmul.f32 %v956, %v457
      %v1070 = vmul.f32 %v961, %v453
      %v1071 = vmul.f32 %v961, %v457
      %v1072 = vmul.f32 %v966, %v453
      %v1073 = vmul.f32 %v966, %v457
      %v1074 = vmul.f32 %v971, %v453
      %v1075 = vmul.f32 %v971, %v457
      %v1076 = vmul.f32 %v976, %v453
      %v1077 = vmul.f32 %v976, %v457
      %v1078 = vmul.f32 %v981, %v453
      %v1079 = vmul.f32 %v981, %v457
      %v1080 = vmul.f32 %v986, %v453
      %v1081 = vmul.f32 %v986, %v457
      %v1082 = vmul.f32 %v991, %v453
      %v1083 = vmul.f32 %v991, %v457
      %v1084 = vmul.f32 %v996, %v453
      %v1085 = vmul.f32 %v996, %v457
      %v1086 = vmul.f32 %v1001, %v453
      %v1087 = vmul.f32 %v1001, %v457
      %v1088 = vmul.f32 %v1006, %v453
      %v1089 = vmul.f32 %v1006, %v457
      %v1090 = vmul.f32 %v1011, %v453
      %v1091 = vmul.f32 %v1011, %v457
      %v1092 = vmul.f32 %v1016, %v453
      %v1093 = vmul.f32 %v1016, %v457
      %v1094 = vmul.f32 %v1021, %v453
      %v1095 = vmul.f32 %v1021, %v457
      %v1096 = vmul.f32 %v1026, %v453
      %v1097 = vmul.f32 %v1026, %v457
      %v1098 = vmul.f32 %v1031, %v453
      %v1099 = vmul.f32 %v1031, %v457
      %v1100 = vmul.f32 %v1036, %v453
      %v1101 = vmul.f32 %v1036, %v457
      %1103 = vset.pattern.permute.xlu0 0
      %1104 = vperm.xlu0 %1103, %v846
      %v1105 = vpop.permute.xlu0 %1104
      %1108 = vset.pattern.permute.xlu0 0
      %1109 = vperm.xlu0 %1108, %v847
      %v1110 = vpop.permute.xlu0 %1109
      %1113 = vset.pattern.permute.xlu0 0
      %1114 = vperm.xlu0 %1113, %v848
      %v1115 = vpop.permute.xlu0 %1114
      %1118 = vset.pattern.permute.xlu0 0
      %1119 = vperm.xlu0 %1118, %v849
      %v1120 = vpop.permute.xlu0 %1119
      %1123 = vset.pattern.permute.xlu0 0
      %1124 = vperm.xlu0 %1123, %v850
      %v1125 = vpop.permute.xlu0 %1124
      %1128 = vset.pattern.permute.xlu0 0
      %1129 = vperm.xlu0 %1128, %v851
      %v1130 = vpop.permute.xlu0 %1129
      %1133 = vset.pattern.permute.xlu0 0
      %1134 = vperm.xlu0 %1133, %v852
      %v1135 = vpop.permute.xlu0 %1134
      %1138 = vset.pattern.permute.xlu0 0
      %1139 = vperm.xlu0 %1138, %v853
      %v1140 = vpop.permute.xlu0 %1139
      %1143 = vset.pattern.permute.xlu0 0
      %1144 = vperm.xlu0 %1143, %v854
      %v1145 = vpop.permute.xlu0 %1144
      %1148 = vset.pattern.permute.xlu0 0
      %1149 = vperm.xlu0 %1148, %v855
      %v1150 = vpop.permute.xlu0 %1149
      %1153 = vset.pattern.permute.xlu0 0
      %1154 = vperm.xlu0 %1153, %v856
      %v1155 = vpop.permute.xlu0 %1154
      %1158 = vset.pattern.permute.xlu0 0
      %1159 = vperm.xlu0 %1158, %v857
      %v1160 = vpop.permute.xlu0 %1159
      %1163 = vset.pattern.permute.xlu0 0
      %1164 = vperm.xlu0 %1163, %v858
      %v1165 = vpop.permute.xlu0 %1164
      %1168 = vset.pattern.permute.xlu0 0
      %1169 = vperm.xlu0 %1168, %v859
      %v1170 = vpop.permute.xlu0 %1169
      %1173 = vset.pattern.permute.xlu0 0
      %1174 = vperm.xlu0 %1173, %v860
      %v1175 = vpop.permute.xlu0 %1174
      %1178 = vset.pattern.permute.xlu0 0
      %1179 = vperm.xlu0 %1178, %v861
      %v1180 = vpop.permute.xlu0 %1179
      %1183 = vset.pattern.permute.xlu0 0
      %1184 = vperm.xlu0 %1183, %v862
      %v1185 = vpop.permute.xlu0 %1184
      %1188 = vset.pattern.permute.xlu0 0
      %1189 = vperm.xlu0 %1188, %v863
      %v1190 = vpop.permute.xlu0 %1189
      %1193 = vset.pattern.permute.xlu0 0
      %1194 = vperm.xlu0 %1193, %v864
      %v1195 = vpop.permute.xlu0 %1194
      %1198 = vset.pattern.permute.xlu0 0
      %1199 = vperm.xlu0 %1198, %v865
      %v1200 = vpop.permute.xlu0 %1199
      %1203 = vset.pattern.permute.xlu0 0
      %1204 = vperm.xlu0 %1203, %v866
      %v1205 = vpop.permute.xlu0 %1204
      %1208 = vset.pattern.permute.xlu0 0
      %1209 = vperm.xlu0 %1208, %v867
      %v1210 = vpop.permute.xlu0 %1209
      %1213 = vset.pattern.permute.xlu0 0
      %1214 = vperm.xlu0 %1213, %v868
      %v1215 = vpop.permute.xlu0 %1214
      %1218 = vset.pattern.permute.xlu0 0
      %1219 = vperm.xlu0 %1218, %v869
      %v1220 = vpop.permute.xlu0 %1219
      %1223 = vset.pattern.permute.xlu0 0
      %1224 = vperm.xlu0 %1223, %v870
      %v1225 = vpop.permute.xlu0 %1224
      %1228 = vset.pattern.permute.xlu0 0
      %1229 = vperm.xlu0 %1228, %v871
      %v1230 = vpop.permute.xlu0 %1229
      %1233 = vset.pattern.permute.xlu0 0
      %1234 = vperm.xlu0 %1233, %v872
      %v1235 = vpop.permute.xlu0 %1234
      %1238 = vset.pattern.permute.xlu0 0
      %1239 = vperm.xlu0 %1238, %v873
      %v1240 = vpop.permute.xlu0 %1239
      %1243 = vset.pattern.permute.xlu0 0
      %1244 = vperm.xlu0 %1243, %v874
      %v1245 = vpop.permute.xlu0 %1244
      %1248 = vset.pattern.permute.xlu0 0
      %1249 = vperm.xlu0 %1248, %v875
      %v1250 = vpop.permute.xlu0 %1249
      %1253 = vset.pattern.permute.xlu0 0
      %1254 = vperm.xlu0 %1253, %v876
      %v1255 = vpop.permute.xlu0 %1254
      %1258 = vset.pattern.permute.xlu0 0
      %1259 = vperm.xlu0 %1258, %v877
      %v1260 = vpop.permute.xlu0 %1259
      %v1262 = vadd.f32 %v1038, %v1105
      %v1263 = vadd.f32 %v1039, %v1105
      %v1264 = vadd.f32 %v1040, %v1110
      %v1265 = vadd.f32 %v1041, %v1110
      %v1266 = vadd.f32 %v1042, %v1115
      %v1267 = vadd.f32 %v1043, %v1115
      %v1268 = vadd.f32 %v1044, %v1120
      %v1269 = vadd.f32 %v1045, %v1120
      %v1270 = vadd.f32 %v1046, %v1125
      %v1271 = vadd.f32 %v1047, %v1125
      %v1272 = vadd.f32 %v1048, %v1130
      %v1273 = vadd.f32 %v1049, %v1130
      %v1274 = vadd.f32 %v1050, %v1135
      %v1275 = vadd.f32 %v1051, %v1135
      %v1276 = vadd.f32 %v1052, %v1140
      %v1277 = vadd.f32 %v1053, %v1140
      %v1278 = vadd.f32 %v1054, %v1145
      %v1279 = vadd.f32 %v1055, %v1145
      %v1280 = vadd.f32 %v1056, %v1150
      %v1281 = vadd.f32 %v1057, %v1150
      %v1282 = vadd.f32 %v1058, %v1155
      %v1283 = vadd.f32 %v1059, %v1155
      %v1284 = vadd.f32 %v1060, %v1160
      %v1285 = vadd.f32 %v1061, %v1160
      %v1286 = vadd.f32 %v1062, %v1165
      %v1287 = vadd.f32 %v1063, %v1165
      %v1288 = vadd.f32 %v1064, %v1170
      %v1289 = vadd.f32 %v1065, %v1170
      %v1290 = vadd.f32 %v1066, %v1175
      %v1291 = vadd.f32 %v1067, %v1175
      %v1292 = vadd.f32 %v1068, %v1180
      %v1293 = vadd.f32 %v1069, %v1180
      %v1294 = vadd.f32 %v1070, %v1185
      %v1295 = vadd.f32 %v1071, %v1185
      %v1296 = vadd.f32 %v1072, %v1190
      %v1297 = vadd.f32 %v1073, %v1190
      %v1298 = vadd.f32 %v1074, %v1195
      %v1299 = vadd.f32 %v1075, %v1195
      %v1300 = vadd.f32 %v1076, %v1200
      %v1301 = vadd.f32 %v1077, %v1200
      %v1302 = vadd.f32 %v1078, %v1205
      %v1303 = vadd.f32 %v1079, %v1205
      %v1304 = vadd.f32 %v1080, %v1210
      %v1305 = vadd.f32 %v1081, %v1210
      %v1306 = vadd.f32 %v1082, %v1215
      %v1307 = vadd.f32 %v1083, %v1215
      %v1308 = vadd.f32 %v1084, %v1220
      %v1309 = vadd.f32 %v1085, %v1220
      %v1310 = vadd.f32 %v1086, %v1225
      %v1311 = vadd.f32 %v1087, %v1225
      %v1312 = vadd.f32 %v1088, %v1230
      %v1313 = vadd.f32 %v1089, %v1230
      %v1314 = vadd.f32 %v1090, %v1235
      %v1315 = vadd.f32 %v1091, %v1235
      %v1316 = vadd.f32 %v1092, %v1240
      %v1317 = vadd.f32 %v1093, %v1240
      %v1318 = vadd.f32 %v1094, %v1245
      %v1319 = vadd.f32 %v1095, %v1245
      %v1320 = vadd.f32 %v1096, %v1250
      %v1321 = vadd.f32 %v1097, %v1250
      %v1322 = vadd.f32 %v1098, %v1255
      %v1323 = vadd.f32 %v1099, %v1255
      %v1324 = vadd.f32 %v1100, %v1260
      %v1325 = vadd.f32 %v1101, %v1260
      %v1326 = vmax.f32 %v1262, 0.0
      %v1327 = vmax.f32 %v1263, 0.0
      %v1328 = vmax.f32 %v1264, 0.0
      %v1329 = vmax.f32 %v1265, 0.0
      %v1330 = vmax.f32 %v1266, 0.0
      %v1331 = vmax.f32 %v1267, 0.0
      %v1332 = vmax.f32 %v1268, 0.0
      %v1333 = vmax.f32 %v1269, 0.0
      %v1334 = vmax.f32 %v1270, 0.0
      %v1335 = vmax.f32 %v1271, 0.0
      %v1336 = vmax.f32 %v1272, 0.0
      %v1337 = vmax.f32 %v1273, 0.0
      %v1338 = vmax.f32 %v1274, 0.0
      %v1339 = vmax.f32 %v1275, 0.0
      %v1340 = vmax.f32 %v1276, 0.0
      %v1341 = vmax.f32 %v1277, 0.0
      %v1342 = vmax.f32 %v1278, 0.0
      %v1343 = vmax.f32 %v1279, 0.0
      %v1344 = vmax.f32 %v1280, 0.0
      %v1345 = vmax.f32 %v1281, 0.0
      %v1346 = vmax.f32 %v1282, 0.0
      %v1347 = vmax.f32 %v1283, 0.0
      %v1348 = vmax.f32 %v1284, 0.0
      %v1349 = vmax.f32 %v1285, 0.0
      %v1350 = vmax.f32 %v1286, 0.0
      %v1351 = vmax.f32 %v1287, 0.0
      %v1352 = vmax.f32 %v1288, 0.0
      %v1353 = vmax.f32 %v1289, 0.0
      %v1354 = vmax.f32 %v1290, 0.0
      %v1355 = vmax.f32 %v1291, 0.0
      %v1356 = vmax.f32 %v1292, 0.0
      %v1357 = vmax.f32 %v1293, 0.0
      %v1358 = vmax.f32 %v1294, 0.0
      %v1359 = vmax.f32 %v1295, 0.0
      %v1360 = vmax.f32 %v1296, 0.0
      %v1361 = vmax.f32 %v1297, 0.0
      %v1362 = vmax.f32 %v1298, 0.0
      %v1363 = vmax.f32 %v1299, 0.0
      %v1364 = vmax.f32 %v1300, 0.0
      %v1365 = vmax.f32 %v1301, 0.0
      %v1366 = vmax.f32 %v1302, 0.0
      %v1367 = vmax.f32 %v1303, 0.0
      %v1368 = vmax.f32 %v1304, 0.0
      %v1369 = vmax.f32 %v1305, 0.0
      %v1370 = vmax.f32 %v1306, 0.0
      %v1371 = vmax.f32 %v1307, 0.0
      %v1372 = vmax.f32 %v1308, 0.0
      %v1373 = vmax.f32 %v1309, 0.0
      %v1374 = vmax.f32 %v1310, 0.0
      %v1375 = vmax.f32 %v1311, 0.0
      %v1376 = vmax.f32 %v1312, 0.0
      %v1377 = vmax.f32 %v1313, 0.0
      %v1378 = vmax.f32 %v1314, 0.0
      %v1379 = vmax.f32 %v1315, 0.0
      %v1380 = vmax.f32 %v1316, 0.0
      %v1381 = vmax.f32 %v1317, 0.0
      %v1382 = vmax.f32 %v1318, 0.0
      %v1383 = vmax.f32 %v1319, 0.0
      %v1384 = vmax.f32 %v1320, 0.0
      %v1385 = vmax.f32 %v1321, 0.0
      %v1386 = vmax.f32 %v1322, 0.0
      %v1387 = vmax.f32 %v1323, 0.0
      %v1388 = vmax.f32 %v1324, 0.0
      %v1389 = vmax.f32 %v1325, 0.0
      %v1390 = vld [vmem:[%s3 + $0x10] sm:$0xff]
      %v1391 = vld [vmem:[%s3 + $0x18] sm:$0xff]
      %1392 = vmatprep.subr.mxu0 %v1327
      %1393 = vmatpush1.msra.mxu0 %v1326
      %1394 = vmatprep.subr.mxu0 %v1329
      %1395 = vmatpush1.msra.mxu0 %v1328
      %1396 = vmatprep.subr.mxu0 %v1331
      %1397 = vmatpush1.msra.mxu0 %v1330
      %1398 = vmatprep.subr.mxu0 %v1333
      %1399 = vmatpush1.msra.mxu0 %v1332
      %1400 = vmatprep.subr.mxu0 %v1335
      %1401 = vmatpush1.msra.mxu0 %v1334
      %1402 = vmatprep.subr.mxu0 %v1337
      %1403 = vmatpush1.msra.mxu0 %v1336
      %1404 = vmatprep.subr.mxu0 %v1339
      %1405 = vmatpush1.msra.mxu0 %v1338
      %1406 = vmatprep.subr.mxu0 %v1341
      %1407 = vmatpush1.msra.mxu0 %v1340
      %1408 = vmatprep.subr.mxu0 %v1343
      %1409 = vmatpush1.msra.mxu0 %v1342
      %1410 = vmatprep.subr.mxu0 %v1345
      %1411 = vmatpush1.msra.mxu0 %v1344
      %1412 = vmatprep.subr.mxu0 %v1347
      %1413 = vmatpush1.msra.mxu0 %v1346
      %1414 = vmatprep.subr.mxu0 %v1349
      %1415 = vmatpush1.msra.mxu0 %v1348
      %1416 = vmatprep.subr.mxu0 %v1351
      %1417 = vmatpush1.msra.mxu0 %v1350
      %1418 = vmatprep.subr.mxu0 %v1353
      %1419 = vmatpush1.msra.mxu0 %v1352
      %1420 = vmatprep.subr.mxu0 %v1355
      %1421 = vmatpush1.msra.mxu0 %v1354
      %1422 = vmatprep.subr.mxu0 %v1357
      %1423 = vmatpush1.msra.mxu0 %v1356
      %1424 = vmatprep.subr.mxu0 %v1359
      %1425 = vmatpush1.msra.mxu0 %v1358
      %1426 = vmatprep.subr.mxu0 %v1361
      %1427 = vmatpush1.msra.mxu0 %v1360
      %1428 = vmatprep.subr.mxu0 %v1363
      %1429 = vmatpush1.msra.mxu0 %v1362
      %1430 = vmatprep.subr.mxu0 %v1365
      %1431 = vmatpush1.msra.mxu0 %v1364
      %1432 = vmatprep.subr.mxu0 %v1367
      %1433 = vmatpush1.msra.mxu0 %v1366
      %1434 = vmatprep.subr.mxu0 %v1369
      %1435 = vmatpush1.msra.mxu0 %v1368
      %1436 = vmatprep.subr.mxu0 %v1371
      %1437 = vmatpush1.msra.mxu0 %v1370
      %1438 = vmatprep.subr.mxu0 %v1373
      %1439 = vmatpush1.msra.mxu0 %v1372
      %1440 = vmatprep.subr.mxu0 %v1375
      %1441 = vmatpush1.msra.mxu0 %v1374
      %1442 = vmatprep.subr.mxu0 %v1377
      %1443 = vmatpush1.msra.mxu0 %v1376
      %1444 = vmatprep.subr.mxu0 %v1379
      %1445 = vmatpush1.msra.mxu0 %v1378
      %1446 = vmatprep.subr.mxu0 %v1381
      %1447 = vmatpush1.msra.mxu0 %v1380
      %1448 = vmatprep.subr.mxu0 %v1383
      %1449 = vmatpush1.msra.mxu0 %v1382
      %1450 = vmatprep.subr.mxu0 %v1385
      %1451 = vmatpush1.msra.mxu0 %v1384
      %1452 = vmatprep.subr.mxu0 %v1387
      %1453 = vmatpush1.msra.mxu0 %v1386
      %1454 = vmatprep.subr.mxu0 %v1389
      %1455 = vmatpush1.msra.mxu0 %v1388
      %1456 = vmatprep.mubr.f32.mxu0 %v1391
      %1457 = vmatmul.mubr.f32.gmra.mrb[0].mxu0 %v1390
      %v1458 = vpop.f32.mrb[0].mxu0
      %v1459 = vadd.f32 0.0, %v1458
      %v1460 = vpop.f32.mrb[0].mxu0
      %v1461 = vadd.f32 0.0, %v1460
      %1462 = vdwg.mxu0
      %1463 = vmatprep.subr.mxu0 %v749
      %1464 = vmatpush1.msra.mxu0 %v748
      %1465 = vmatprep.subr.mxu0 %v751
      %1466 = vmatpush1.msra.mxu0 %v750
      %1467 = vmatprep.subr.mxu0 %v753
      %1468 = vmatpush1.msra.mxu0 %v752
      %1469 = vmatprep.subr.mxu0 %v755
      %1470 = vmatpush1.msra.mxu0 %v754
      %1471 = vmatprep.subr.mxu0 %v757
      %1472 = vmatpush1.msra.mxu0 %v756
      %1473 = vmatprep.subr.mxu0 %v759
      %1474 = vmatpush1.msra.mxu0 %v758
      %1475 = vmatprep.subr.mxu0 %v761
      %1476 = vmatpush1.msra.mxu0 %v760
      %1477 = vmatprep.subr.mxu0 %v763
      %1478 = vmatpush1.msra.mxu0 %v762
      %1479 = vmatprep.subr.mxu0 %v765
      %1480 = vmatpush1.msra.mxu0 %v764
      %1481 = vmatprep.subr.mxu0 %v767
      %1482 = vmatpush1.msra.mxu0 %v766
      %1483 = vmatprep.subr.mxu0 %v769
      %1484 = vmatpush1.msra.mxu0 %v768
      %1485 = vmatprep.subr.mxu0 %v771
      %1486 = vmatpush1.msra.mxu0 %v770
      %1487 = vmatprep.subr.mxu0 %v773
      %1488 = vmatpush1.msra.mxu0 %v772
      %1489 = vmatprep.subr.mxu0 %v775
      %1490 = vmatpush1.msra.mxu0 %v774
      %1491 = vmatprep.subr.mxu0 %v777
      %1492 = vmatpush1.msra.mxu0 %v776
      %1493 = vmatprep.subr.mxu0 %v779
      %1494 = vmatpush1.msra.mxu0 %v778
      %1495 = vmatprep.subr.mxu0 %v781
      %1496 = vmatpush1.msra.mxu0 %v780
      %1497 = vmatprep.subr.mxu0 %v783
      %1498 = vmatpush1.msra.mxu0 %v782
      %1499 = vmatprep.subr.mxu0 %v785
      %1500 = vmatpush1.msra.mxu0 %v784
      %1501 = vmatprep.subr.mxu0 %v787
      %1502 = vmatpush1.msra.mxu0 %v786
      %1503 = vmatprep.subr.mxu0 %v789
      %1504 = vmatpush1.msra.mxu0 %v788
      %1505 = vmatprep.subr.mxu0 %v791
      %1506 = vmatpush1.msra.mxu0 %v790
      %1507 = vmatprep.subr.mxu0 %v793
      %1508 = vmatpush1.msra.mxu0 %v792
      %1509 = vmatprep.subr.mxu0 %v795
      %1510 = vmatpush1.msra.mxu0 %v794
      %1511 = vmatprep.subr.mxu0 %v797
      %1512 = vmatpush1.msra.mxu0 %v796
      %1513 = vmatprep.subr.mxu0 %v799
      %1514 = vmatpush1.msra.mxu0 %v798
      %1515 = vmatprep.subr.mxu0 %v801
      %1516 = vmatpush1.msra.mxu0 %v800
      %1517 = vmatprep.subr.mxu0 %v803
      %1518 = vmatpush1.msra.mxu0 %v802
      %1519 = vmatprep.subr.mxu0 %v805
      %1520 = vmatpush1.msra.mxu0 %v804
      %1521 = vmatprep.subr.mxu0 %v807
      %1522 = vmatpush1.msra.mxu0 %v806
      %1523 = vmatprep.subr.mxu0 %v809
      %1524 = vmatpush1.msra.mxu0 %v808
      %1525 = vmatprep.subr.mxu0 %v811
      %1526 = vmatpush1.msra.mxu0 %v810
      %1527 = vmatprep.mubr.f32.mxu0 %v813
      %1528 = vmatmul.mubr.f32.gmra.mrb[0].mxu0 %v812
      %v1529 = vpop.f32.mrb[0].mxu0
      %v1530 = vadd.f32 %v1459, %v1529
      %v1531 = vpop.f32.mrb[0].mxu0
      %v1532 = vadd.f32 %v1461, %v1531
      %1533 = vdwg.mxu0
      %v1534 = vld [vmem:[%s1 + $0x200] sm:$0xff]
      %v1535 = vld [vmem:[%s1 + $0x208] sm:$0xff]
      %v1536 = vld [vmem:[%s1 + $0x210] sm:$0xff]
      %v1537 = vld [vmem:[%s1 + $0x218] sm:$0xff]
      %v1538 = vld [vmem:[%s1 + $0x220] sm:$0xff]
      %v1539 = vld [vmem:[%s1 + $0x228] sm:$0xff]
      %v1540 = vld [vmem:[%s1 + $0x230] sm:$0xff]
      %v1541 = vld [vmem:[%s1 + $0x238] sm:$0xff]
      %v1542 = vld [vmem:[%s1 + $0x240] sm:$0xff]
      %v1543 = vld [vmem:[%s1 + $0x248] sm:$0xff]
      %v1544 = vld [vmem:[%s1 + $0x250] sm:$0xff]
      %v1545 = vld [vmem:[%s1 + $0x258] sm:$0xff]
      %v1546 = vld [vmem:[%s1 + $0x260] sm:$0xff]
      %v1547 = vld [vmem:[%s1 + $0x268] sm:$0xff]
      %v1548 = vld [vmem:[%s1 + $0x270] sm:$0xff]
      %v1549 = vld [vmem:[%s1 + $0x278] sm:$0xff]
      %v1550 = vld [vmem:[%s1 + $0x280] sm:$0xff]
      %v1551 = vld [vmem:[%s1 + $0x288] sm:$0xff]
      %v1552 = vld [vmem:[%s1 + $0x290] sm:$0xff]
      %v1553 = vld [vmem:[%s1 + $0x298] sm:$0xff]
      %v1554 = vld [vmem:[%s1 + $0x2a0] sm:$0xff]
      %v1555 = vld [vmem:[%s1 + $0x2a8] sm:$0xff]
      %v1556 = vld [vmem:[%s1 + $0x2b0] sm:$0xff]
      %v1557 = vld [vmem:[%s1 + $0x2b8] sm:$0xff]
      %v1558 = vld [vmem:[%s1 + $0x2c0] sm:$0xff]
      %v1559 = vld [vmem:[%s1 + $0x2c8] sm:$0xff]
      %v1560 = vld [vmem:[%s1 + $0x2d0] sm:$0xff]
      %v1561 = vld [vmem:[%s1 + $0x2d8] sm:$0xff]
      %v1562 = vld [vmem:[%s1 + $0x2e0] sm:$0xff]
      %v1563 = vld [vmem:[%s1 + $0x2e8] sm:$0xff]
      %v1564 = vld [vmem:[%s1 + $0x2f0] sm:$0xff]
      %v1565 = vld [vmem:[%s1 + $0x2f8] sm:$0xff]
      %v1566 = vld [vmem:[%s2 + $0x200] sm:$0xff]
      %v1567 = vld [vmem:[%s2 + $0x208] sm:$0xff]
      %v1568 = vld [vmem:[%s2 + $0x210] sm:$0xff]
      %v1569 = vld [vmem:[%s2 + $0x218] sm:$0xff]
      %v1570 = vld [vmem:[%s2 + $0x220] sm:$0xff]
      %v1571 = vld [vmem:[%s2 + $0x228] sm:$0xff]
      %v1572 = vld [vmem:[%s2 + $0x230] sm:$0xff]
      %v1573 = vld [vmem:[%s2 + $0x238] sm:$0xff]
      %v1574 = vld [vmem:[%s2 + $0x240] sm:$0xff]
      %v1575 = vld [vmem:[%s2 + $0x248] sm:$0xff]
      %v1576 = vld [vmem:[%s2 + $0x250] sm:$0xff]
      %v1577 = vld [vmem:[%s2 + $0x258] sm:$0xff]
      %v1578 = vld [vmem:[%s2 + $0x260] sm:$0xff]
      %v1579 = vld [vmem:[%s2 + $0x268] sm:$0xff]
      %v1580 = vld [vmem:[%s2 + $0x270] sm:$0xff]
      %v1581 = vld [vmem:[%s2 + $0x278] sm:$0xff]
      %v1582 = vld [vmem:[%s2 + $0x280] sm:$0xff]
      %v1583 = vld [vmem:[%s2 + $0x288] sm:$0xff]
      %v1584 = vld [vmem:[%s2 + $0x290] sm:$0xff]
      %v1585 = vld [vmem:[%s2 + $0x298] sm:$0xff]
      %v1586 = vld [vmem:[%s2 + $0x2a0] sm:$0xff]
      %v1587 = vld [vmem:[%s2 + $0x2a8] sm:$0xff]
      %v1588 = vld [vmem:[%s2 + $0x2b0] sm:$0xff]
      %v1589 = vld [vmem:[%s2 + $0x2b8] sm:$0xff]
      %v1590 = vld [vmem:[%s2 + $0x2c0] sm:$0xff]
      %v1591 = vld [vmem:[%s2 + $0x2c8] sm:$0xff]
      %v1592 = vld [vmem:[%s2 + $0x2d0] sm:$0xff]
      %v1593 = vld [vmem:[%s2 + $0x2d8] sm:$0xff]
      %v1594 = vld [vmem:[%s2 + $0x2e0] sm:$0xff]
      %v1595 = vld [vmem:[%s2 + $0x2e8] sm:$0xff]
      %v1596 = vld [vmem:[%s2 + $0x2f0] sm:$0xff]
      %v1597 = vld [vmem:[%s2 + $0x2f8] sm:$0xff]
      %1599 = vset.pattern.permute.xlu0 0
      %1600 = vperm.xlu0 %1599, %v1534
      %v1601 = vpop.permute.xlu0 %1600
      %1604 = vset.pattern.permute.xlu0 0
      %1605 = vperm.xlu0 %1604, %v1535
      %v1606 = vpop.permute.xlu0 %1605
      %1609 = vset.pattern.permute.xlu0 0
      %1610 = vperm.xlu0 %1609, %v1536
      %v1611 = vpop.permute.xlu0 %1610
      %1614 = vset.pattern.permute.xlu0 0
      %1615 = vperm.xlu0 %1614, %v1537
      %v1616 = vpop.permute.xlu0 %1615
      %1619 = vset.pattern.permute.xlu0 0
      %1620 = vperm.xlu0 %1619, %v1538
      %v1621 = vpop.permute.xlu0 %1620
      %1624 = vset.pattern.permute.xlu0 0
      %1625 = vperm.xlu0 %1624, %v1539
      %v1626 = vpop.permute.xlu0 %1625
      %1629 = vset.pattern.permute.xlu0 0
      %1630 = vperm.xlu0 %1629, %v1540
      %v1631 = vpop.permute.xlu0 %1630
      %1634 = vset.pattern.permute.xlu0 0
      %1635 = vperm.xlu0 %1634, %v1541
      %v1636 = vpop.permute.xlu0 %1635
      %1639 = vset.pattern.permute.xlu0 0
      %1640 = vperm.xlu0 %1639, %v1542
      %v1641 = vpop.permute.xlu0 %1640
      %1644 = vset.pattern.permute.xlu0 0
      %1645 = vperm.xlu0 %1644, %v1543
      %v1646 = vpop.permute.xlu0 %1645
      %1649 = vset.pattern.permute.xlu0 0
      %1650 = vperm.xlu0 %1649, %v1544
      %v1651 = vpop.permute.xlu0 %1650
      %1654 = vset.pattern.permute.xlu0 0
      %1655 = vperm.xlu0 %1654, %v1545
      %v1656 = vpop.permute.xlu0 %1655
      %1659 = vset.pattern.permute.xlu0 0
      %1660 = vperm.xlu0 %1659, %v1546
      %v1661 = vpop.permute.xlu0 %1660
      %1664 = vset.pattern.permute.xlu0 0
      %1665 = vperm.xlu0 %1664, %v1547
      %v1666 = vpop.permute.xlu0 %1665
      %1669 = vset.pattern.permute.xlu0 0
      %1670 = vperm.xlu0 %1669, %v1548
      %v1671 = vpop.permute.xlu0 %1670
      %1674 = vset.pattern.permute.xlu0 0
      %1675 = vperm.xlu0 %1674, %v1549
      %v1676 = vpop.permute.xlu0 %1675
      %1679 = vset.pattern.permute.xlu0 0
      %1680 = vperm.xlu0 %1679, %v1550
      %v1681 = vpop.permute.xlu0 %1680
      %1684 = vset.pattern.permute.xlu0 0
      %1685 = vperm.xlu0 %1684, %v1551
      %v1686 = vpop.permute.xlu0 %1685
      %1689 = vset.pattern.permute.xlu0 0
      %1690 = vperm.xlu0 %1689, %v1552
      %v1691 = vpop.permute.xlu0 %1690
      %1694 = vset.pattern.permute.xlu0 0
      %1695 = vperm.xlu0 %1694, %v1553
      %v1696 = vpop.permute.xlu0 %1695
      %1699 = vset.pattern.permute.xlu0 0
      %1700 = vperm.xlu0 %1699, %v1554
      %v1701 = vpop.permute.xlu0 %1700
      %1704 = vset.pattern.permute.xlu0 0
      %1705 = vperm.xlu0 %1704, %v1555
      %v1706 = vpop.permute.xlu0 %1705
      %1709 = vset.pattern.permute.xlu0 0
      %1710 = vperm.xlu0 %1709, %v1556
      %v1711 = vpop.permute.xlu0 %1710
      %1714 = vset.pattern.permute.xlu0 0
      %1715 = vperm.xlu0 %1714, %v1557
      %v1716 = vpop.permute.xlu0 %1715
      %1719 = vset.pattern.permute.xlu0 0
      %1720 = vperm.xlu0 %1719, %v1558
      %v1721 = vpop.permute.xlu0 %1720
      %1724 = vset.pattern.permute.xlu0 0
      %1725 = vperm.xlu0 %1724, %v1559
      %v1726 = vpop.permute.xlu0 %1725
      %1729 = vset.pattern.permute.xlu0 0
      %1730 = vperm.xlu0 %1729, %v1560
      %v1731 = vpop.permute.xlu0 %1730
      %1734 = vset.pattern.permute.xlu0 0
      %1735 = vperm.xlu0 %1734, %v1561
      %v1736 = vpop.permute.xlu0 %1735
      %1739 = vset.pattern.permute.xlu0 0
      %1740 = vperm.xlu0 %1739, %v1562
      %v1741 = vpop.permute.xlu0 %1740
      %1744 = vset.pattern.permute.xlu0 0
      %1745 = vperm.xlu0 %1744, %v1563
      %v1746 = vpop.permute.xlu0 %1745
      %1749 = vset.pattern.permute.xlu0 0
      %1750 = vperm.xlu0 %1749, %v1564
      %v1751 = vpop.permute.xlu0 %1750
      %1754 = vset.pattern.permute.xlu0 0
      %1755 = vperm.xlu0 %1754, %v1565
      %v1756 = vpop.permute.xlu0 %1755
      %v1758 = vmul.f32 %v1601, %v453
      %v1759 = vmul.f32 %v1601, %v457
      %v1760 = vmul.f32 %v1606, %v453
      %v1761 = vmul.f32 %v1606, %v457
      %v1762 = vmul.f32 %v1611, %v453
      %v1763 = vmul.f32 %v1611, %v457
      %v1764 = vmul.f32 %v1616, %v453
      %v1765 = vmul.f32 %v1616, %v457
      %v1766 = vmul.f32 %v1621, %v453
      %v1767 = vmul.f32 %v1621, %v457
      %v1768 = vmul.f32 %v1626, %v453
      %v1769 = vmul.f32 %v1626, %v457
      %v1770 = vmul.f32 %v1631, %v453
      %v1771 = vmul.f32 %v1631, %v457
      %v1772 = vmul.f32 %v1636, %v453
      %v1773 = vmul.f32 %v1636, %v457
      %v1774 = vmul.f32 %v1641, %v453
      %v1775 = vmul.f32 %v1641, %v457
      %v1776 = vmul.f32 %v1646, %v453
      %v1777 = vmul.f32 %v1646, %v457
      %v1778 = vmul.f32 %v1651, %v453
      %v1779 = vmul.f32 %v1651, %v457
      %v1780 = vmul.f32 %v1656, %v453
      %v1781 = vmul.f32 %v1656, %v457
      %v1782 = vmul.f32 %v1661, %v453
      %v1783 = vmul.f32 %v1661, %v457
      %v1784 = vmul.f32 %v1666, %v453
      %v1785 = vmul.f32 %v1666, %v457
      %v1786 = vmul.f32 %v1671, %v453
      %v1787 = vmul.f32 %v1671, %v457
      %v1788 = vmul.f32 %v1676, %v453
      %v1789 = vmul.f32 %v1676, %v457
      %v1790 = vmul.f32 %v1681, %v453
      %v1791 = vmul.f32 %v1681, %v457
      %v1792 = vmul.f32 %v1686, %v453
      %v1793 = vmul.f32 %v1686, %v457
      %v1794 = vmul.f32 %v1691, %v453
      %v1795 = vmul.f32 %v1691, %v457
      %v1796 = vmul.f32 %v1696, %v453
      %v1797 = vmul.f32 %v1696, %v457
      %v1798 = vmul.f32 %v1701, %v453
      %v1799 = vmul.f32 %v1701, %v457
      %v1800 = vmul.f32 %v1706, %v453
      %v1801 = vmul.f32 %v1706, %v457
      %v1802 = vmul.f32 %v1711, %v453
      %v1803 = vmul.f32 %v1711, %v457
      %v1804 = vmul.f32 %v1716, %v453
      %v1805 = vmul.f32 %v1716, %v457
      %v1806 = vmul.f32 %v1721, %v453
      %v1807 = vmul.f32 %v1721, %v457
      %v1808 = vmul.f32 %v1726, %v453
      %v1809 = vmul.f32 %v1726, %v457
      %v1810 = vmul.f32 %v1731, %v453
      %v1811 = vmul.f32 %v1731, %v457
      %v1812 = vmul.f32 %v1736, %v453
      %v1813 = vmul.f32 %v1736, %v457
      %v1814 = vmul.f32 %v1741, %v453
      %v1815 = vmul.f32 %v1741, %v457
      %v1816 = vmul.f32 %v1746, %v453
      %v1817 = vmul.f32 %v1746, %v457
      %v1818 = vmul.f32 %v1751, %v453
      %v1819 = vmul.f32 %v1751, %v457
      %v1820 = vmul.f32 %v1756, %v453
      %v1821 = vmul.f32 %v1756, %v457
      %1823 = vset.pattern.permute.xlu0 0
      %1824 = vperm.xlu0 %1823, %v1566
      %v1825 = vpop.permute.xlu0 %1824
      %1828 = vset.pattern.permute.xlu0 0
      %1829 = vperm.xlu0 %1828, %v1567
      %v1830 = vpop.permute.xlu0 %1829
      %1833 = vset.pattern.permute.xlu0 0
      %1834 = vperm.xlu0 %1833, %v1568
      %v1835 = vpop.permute.xlu0 %1834
      %1838 = vset.pattern.permute.xlu0 0
      %1839 = vperm.xlu0 %1838, %v1569
      %v1840 = vpop.permute.xlu0 %1839
      %1843 = vset.pattern.permute.xlu0 0
      %1844 = vperm.xlu0 %1843, %v1570
      %v1845 = vpop.permute.xlu0 %1844
      %1848 = vset.pattern.permute.xlu0 0
      %1849 = vperm.xlu0 %1848, %v1571
      %v1850 = vpop.permute.xlu0 %1849
      %1853 = vset.pattern.permute.xlu0 0
      %1854 = vperm.xlu0 %1853, %v1572
      %v1855 = vpop.permute.xlu0 %1854
      %1858 = vset.pattern.permute.xlu0 0
      %1859 = vperm.xlu0 %1858, %v1573
      %v1860 = vpop.permute.xlu0 %1859
      %1863 = vset.pattern.permute.xlu0 0
      %1864 = vperm.xlu0 %1863, %v1574
      %v1865 = vpop.permute.xlu0 %1864
      %1868 = vset.pattern.permute.xlu0 0
      %1869 = vperm.xlu0 %1868, %v1575
      %v1870 = vpop.permute.xlu0 %1869
      %1873 = vset.pattern.permute.xlu0 0
      %1874 = vperm.xlu0 %1873, %v1576
      %v1875 = vpop.permute.xlu0 %1874
      %1878 = vset.pattern.permute.xlu0 0
      %1879 = vperm.xlu0 %1878, %v1577
      %v1880 = vpop.permute.xlu0 %1879
      %1883 = vset.pattern.permute.xlu0 0
      %1884 = vperm.xlu0 %1883, %v1578
      %v1885 = vpop.permute.xlu0 %1884
      %1888 = vset.pattern.permute.xlu0 0
      %1889 = vperm.xlu0 %1888, %v1579
      %v1890 = vpop.permute.xlu0 %1889
      %1893 = vset.pattern.permute.xlu0 0
      %1894 = vperm.xlu0 %1893, %v1580
      %v1895 = vpop.permute.xlu0 %1894
      %1898 = vset.pattern.permute.xlu0 0
      %1899 = vperm.xlu0 %1898, %v1581
      %v1900 = vpop.permute.xlu0 %1899
      %1903 = vset.pattern.permute.xlu0 0
      %1904 = vperm.xlu0 %1903, %v1582
      %v1905 = vpop.permute.xlu0 %1904
      %1908 = vset.pattern.permute.xlu0 0
      %1909 = vperm.xlu0 %1908, %v1583
      %v1910 = vpop.permute.xlu0 %1909
      %1913 = vset.pattern.permute.xlu0 0
      %1914 = vperm.xlu0 %1913, %v1584
      %v1915 = vpop.permute.xlu0 %1914
      %1918 = vset.pattern.permute.xlu0 0
      %1919 = vperm.xlu0 %1918, %v1585
      %v1920 = vpop.permute.xlu0 %1919
      %1923 = vset.pattern.permute.xlu0 0
      %1924 = vperm.xlu0 %1923, %v1586
      %v1925 = vpop.permute.xlu0 %1924
      %1928 = vset.pattern.permute.xlu0 0
      %1929 = vperm.xlu0 %1928, %v1587
      %v1930 = vpop.permute.xlu0 %1929
      %1933 = vset.pattern.permute.xlu0 0
      %1934 = vperm.xlu0 %1933, %v1588
      %v1935 = vpop.permute.xlu0 %1934
      %1938 = vset.pattern.permute.xlu0 0
      %1939 = vperm.xlu0 %1938, %v1589
      %v1940 = vpop.permute.xlu0 %1939
      %1943 = vset.pattern.permute.xlu0 0
      %1944 = vperm.xlu0 %1943, %v1590
      %v1945 = vpop.permute.xlu0 %1944
      %1948 = vset.pattern.permute.xlu0 0
      %1949 = vperm.xlu0 %1948, %v1591
      %v1950 = vpop.permute.xlu0 %1949
      %1953 = vset.pattern.permute.xlu0 0
      %1954 = vperm.xlu0 %1953, %v1592
      %v1955 = vpop.permute.xlu0 %1954
      %1958 = vset.pattern.permute.xlu0 0
      %1959 = vperm.xlu0 %1958, %v1593
      %v1960 = vpop.permute.xlu0 %1959
      %1963 = vset.pattern.permute.xlu0 0
      %1964 = vperm.xlu0 %1963, %v1594
      %v1965 = vpop.permute.xlu0 %1964
      %1968 = vset.pattern.permute.xlu0 0
      %1969 = vperm.xlu0 %1968, %v1595
      %v1970 = vpop.permute.xlu0 %1969
      %1973 = vset.pattern.permute.xlu0 0
      %1974 = vperm.xlu0 %1973, %v1596
      %v1975 = vpop.permute.xlu0 %1974
      %1978 = vset.pattern.permute.xlu0 0
      %1979 = vperm.xlu0 %1978, %v1597
      %v1980 = vpop.permute.xlu0 %1979
      %v1982 = vadd.f32 %v1758, %v1825
      %v1983 = vadd.f32 %v1759, %v1825
      %v1984 = vadd.f32 %v1760, %v1830
      %v1985 = vadd.f32 %v1761, %v1830
      %v1986 = vadd.f32 %v1762, %v1835
      %v1987 = vadd.f32 %v1763, %v1835
      %v1988 = vadd.f32 %v1764, %v1840
      %v1989 = vadd.f32 %v1765, %v1840
      %v1990 = vadd.f32 %v1766, %v1845
      %v1991 = vadd.f32 %v1767, %v1845
      %v1992 = vadd.f32 %v1768, %v1850
      %v1993 = vadd.f32 %v1769, %v1850
      %v1994 = vadd.f32 %v1770, %v1855
      %v1995 = vadd.f32 %v1771, %v1855
      %v1996 = vadd.f32 %v1772, %v1860
      %v1997 = vadd.f32 %v1773, %v1860
      %v1998 = vadd.f32 %v1774, %v1865
      %v1999 = vadd.f32 %v1775, %v1865
      %v2000 = vadd.f32 %v1776, %v1870
      %v2001 = vadd.f32 %v1777, %v1870
      %v2002 = vadd.f32 %v1778, %v1875
      %v2003 = vadd.f32 %v1779, %v1875
      %v2004 = vadd.f32 %v1780, %v1880
      %v2005 = vadd.f32 %v1781, %v1880
      %v2006 = vadd.f32 %v1782, %v1885
      %v2007 = vadd.f32 %v1783, %v1885
      %v2008 = vadd.f32 %v1784, %v1890
      %v2009 = vadd.f32 %v1785, %v1890
      %v2010 = vadd.f32 %v1786, %v1895
      %v2011 = vadd.f32 %v1787, %v1895
      %v2012 = vadd.f32 %v1788, %v1900
      %v2013 = vadd.f32 %v1789, %v1900
      %v2014 = vadd.f32 %v1790, %v1905
      %v2015 = vadd.f32 %v1791, %v1905
      %v2016 = vadd.f32 %v1792, %v1910
      %v2017 = vadd.f32 %v1793, %v1910
      %v2018 = vadd.f32 %v1794, %v1915
      %v2019 = vadd.f32 %v1795, %v1915
      %v2020 = vadd.f32 %v1796, %v1920
      %v2021 = vadd.f32 %v1797, %v1920
      %v2022 = vadd.f32 %v1798, %v1925
      %v2023 = vadd.f32 %v1799, %v1925
      %v2024 = vadd.f32 %v1800, %v1930
      %v2025 = vadd.f32 %v1801, %v1930
      %v2026 = vadd.f32 %v1802, %v1935
      %v2027 = vadd.f32 %v1803, %v1935
      %v2028 = vadd.f32 %v1804, %v1940
      %v2029 = vadd.f32 %v1805, %v1940
      %v2030 = vadd.f32 %v1806, %v1945
      %v2031 = vadd.f32 %v1807, %v1945
      %v2032 = vadd.f32 %v1808, %v1950
      %v2033 = vadd.f32 %v1809, %v1950
      %v2034 = vadd.f32 %v1810, %v1955
      %v2035 = vadd.f32 %v1811, %v1955
      %v2036 = vadd.f32 %v1812, %v1960
      %v2037 = vadd.f32 %v1813, %v1960
      %v2038 = vadd.f32 %v1814, %v1965
      %v2039 = vadd.f32 %v1815, %v1965
      %v2040 = vadd.f32 %v1816, %v1970
      %v2041 = vadd.f32 %v1817, %v1970
      %v2042 = vadd.f32 %v1818, %v1975
      %v2043 = vadd.f32 %v1819, %v1975
      %v2044 = vadd.f32 %v1820, %v1980
      %v2045 = vadd.f32 %v1821, %v1980
      %v2046 = vmax.f32 %v1982, 0.0
      %v2047 = vmax.f32 %v1983, 0.0
      %v2048 = vmax.f32 %v1984, 0.0
      %v2049 = vmax.f32 %v1985, 0.0
      %v2050 = vmax.f32 %v1986, 0.0
      %v2051 = vmax.f32 %v1987, 0.0
      %v2052 = vmax.f32 %v1988, 0.0
      %v2053 = vmax.f32 %v1989, 0.0
      %v2054 = vmax.f32 %v1990, 0.0
      %v2055 = vmax.f32 %v1991, 0.0
      %v2056 = vmax.f32 %v1992, 0.0
      %v2057 = vmax.f32 %v1993, 0.0
      %v2058 = vmax.f32 %v1994, 0.0
      %v2059 = vmax.f32 %v1995, 0.0
      %v2060 = vmax.f32 %v1996, 0.0
      %v2061 = vmax.f32 %v1997, 0.0
      %v2062 = vmax.f32 %v1998, 0.0
      %v2063 = vmax.f32 %v1999, 0.0
      %v2064 = vmax.f32 %v2000, 0.0
      %v2065 = vmax.f32 %v2001, 0.0
      %v2066 = vmax.f32 %v2002, 0.0
      %v2067 = vmax.f32 %v2003, 0.0
      %v2068 = vmax.f32 %v2004, 0.0
      %v2069 = vmax.f32 %v2005, 0.0
      %v2070 = vmax.f32 %v2006, 0.0
      %v2071 = vmax.f32 %v2007, 0.0
      %v2072 = vmax.f32 %v2008, 0.0
      %v2073 = vmax.f32 %v2009, 0.0
      %v2074 = vmax.f32 %v2010, 0.0
      %v2075 = vmax.f32 %v2011, 0.0
      %v2076 = vmax.f32 %v2012, 0.0
      %v2077 = vmax.f32 %v2013, 0.0
      %v2078 = vmax.f32 %v2014, 0.0
      %v2079 = vmax.f32 %v2015, 0.0
      %v2080 = vmax.f32 %v2016, 0.0
      %v2081 = vmax.f32 %v2017, 0.0
      %v2082 = vmax.f32 %v2018, 0.0
      %v2083 = vmax.f32 %v2019, 0.0
      %v2084 = vmax.f32 %v2020, 0.0
      %v2085 = vmax.f32 %v2021, 0.0
      %v2086 = vmax.f32 %v2022, 0.0
      %v2087 = vmax.f32 %v2023, 0.0
      %v2088 = vmax.f32 %v2024, 0.0
      %v2089 = vmax.f32 %v2025, 0.0
      %v2090 = vmax.f32 %v2026, 0.0
      %v2091 = vmax.f32 %v2027, 0.0
      %v2092 = vmax.f32 %v2028, 0.0
      %v2093 = vmax.f32 %v2029, 0.0
      %v2094 = vmax.f32 %v2030, 0.0
      %v2095 = vmax.f32 %v2031, 0.0
      %v2096 = vmax.f32 %v2032, 0.0
      %v2097 = vmax.f32 %v2033, 0.0
      %v2098 = vmax.f32 %v2034, 0.0
      %v2099 = vmax.f32 %v2035, 0.0
      %v2100 = vmax.f32 %v2036, 0.0
      %v2101 = vmax.f32 %v2037, 0.0
      %v2102 = vmax.f32 %v2038, 0.0
      %v2103 = vmax.f32 %v2039, 0.0
      %v2104 = vmax.f32 %v2040, 0.0
      %v2105 = vmax.f32 %v2041, 0.0
      %v2106 = vmax.f32 %v2042, 0.0
      %v2107 = vmax.f32 %v2043, 0.0
      %v2108 = vmax.f32 %v2044, 0.0
      %v2109 = vmax.f32 %v2045, 0.0
      %v2110 = vld [vmem:[%s3 + $0x20] sm:$0xff]
      %v2111 = vld [vmem:[%s3 + $0x28] sm:$0xff]
      %2112 = vmatprep.subr.mxu0 %v2047
      %2113 = vmatpush1.msra.mxu0 %v2046
      %2114 = vmatprep.subr.mxu0 %v2049
      %2115 = vmatpush1.msra.mxu0 %v2048
      %2116 = vmatprep.subr.mxu0 %v2051
      %2117 = vmatpush1.msra.mxu0 %v2050
      %2118 = vmatprep.subr.mxu0 %v2053
      %2119 = vmatpush1.msra.mxu0 %v2052
      %2120 = vmatprep.subr.mxu0 %v2055
      %2121 = vmatpush1.msra.mxu0 %v2054
      %2122 = vmatprep.subr.mxu0 %v2057
      %2123 = vmatpush1.msra.mxu0 %v2056
      %2124 = vmatprep.subr.mxu0 %v2059
      %2125 = vmatpush1.msra.mxu0 %v2058
      %2126 = vmatprep.subr.mxu0 %v2061
      %2127 = vmatpush1.msra.mxu0 %v2060
      %2128 = vmatprep.subr.mxu0 %v2063
      %2129 = vmatpush1.msra.mxu0 %v2062
      %2130 = vmatprep.subr.mxu0 %v2065
      %2131 = vmatpush1.msra.mxu0 %v2064
      %2132 = vmatprep.subr.mxu0 %v2067
      %2133 = vmatpush1.msra.mxu0 %v2066
      %2134 = vmatprep.subr.mxu0 %v2069
      %2135 = vmatpush1.msra.mxu0 %v2068
      %2136 = vmatprep.subr.mxu0 %v2071
      %2137 = vmatpush1.msra.mxu0 %v2070
      %2138 = vmatprep.subr.mxu0 %v2073
      %2139 = vmatpush1.msra.mxu0 %v2072
      %2140 = vmatprep.subr.mxu0 %v2075
      %2141 = vmatpush1.msra.mxu0 %v2074
      %2142 = vmatprep.subr.mxu0 %v2077
      %2143 = vmatpush1.msra.mxu0 %v2076
      %2144 = vmatprep.subr.mxu0 %v2079
      %2145 = vmatpush1.msra.mxu0 %v2078
      %2146 = vmatprep.subr.mxu0 %v2081
      %2147 = vmatpush1.msra.mxu0 %v2080
      %2148 = vmatprep.subr.mxu0 %v2083
      %2149 = vmatpush1.msra.mxu0 %v2082
      %2150 = vmatprep.subr.mxu0 %v2085
      %2151 = vmatpush1.msra.mxu0 %v2084
      %2152 = vmatprep.subr.mxu0 %v2087
      %2153 = vmatpush1.msra.mxu0 %v2086
      %2154 = vmatprep.subr.mxu0 %v2089
      %2155 = vmatpush1.msra.mxu0 %v2088
      %2156 = vmatprep.subr.mxu0 %v2091
      %2157 = vmatpush1.msra.mxu0 %v2090
      %2158 = vmatprep.subr.mxu0 %v2093
      %2159 = vmatpush1.msra.mxu0 %v2092
      %2160 = vmatprep.subr.mxu0 %v2095
      %2161 = vmatpush1.msra.mxu0 %v2094
      %2162 = vmatprep.subr.mxu0 %v2097
      %2163 = vmatpush1.msra.mxu0 %v2096
      %2164 = vmatprep.subr.mxu0 %v2099
      %2165 = vmatpush1.msra.mxu0 %v2098
      %2166 = vmatprep.subr.mxu0 %v2101
      %2167 = vmatpush1.msra.mxu0 %v2100
      %2168 = vmatprep.subr.mxu0 %v2103
      %2169 = vmatpush1.msra.mxu0 %v2102
      %2170 = vmatprep.subr.mxu0 %v2105
      %2171 = vmatpush1.msra.mxu0 %v2104
      %2172 = vmatprep.subr.mxu0 %v2107
      %2173 = vmatpush1.msra.mxu0 %v2106
      %2174 = vmatprep.subr.mxu0 %v2109
      %2175 = vmatpush1.msra.mxu0 %v2108
      %2176 = vmatprep.mubr.f32.mxu0 %v2111
      %2177 = vmatmul.mubr.f32.gmra.mrb[0].mxu0 %v2110
      %v2178 = vpop.f32.mrb[0].mxu0
      %v2179 = vadd.f32 0.0, %v2178
      %v2180 = vpop.f32.mrb[0].mxu0
      %v2181 = vadd.f32 0.0, %v2180
      %2182 = vdwg.mxu0
      %v2183 = vadd.f32 %v1530, %v2179
      %v2184 = vadd.f32 %v1532, %v2181
      %v2185 = vld [vmem:[%s1 + $0x300] sm:$0xff]
      %v2186 = vld [vmem:[%s1 + $0x308] sm:$0xff]
      %v2187 = vld [vmem:[%s1 + $0x310] sm:$0xff]
      %v2188 = vld [vmem:[%s1 + $0x318] sm:$0xff]
      %v2189 = vld [vmem:[%s1 + $0x320] sm:$0xff]
      %v2190 = vld [vmem:[%s1 + $0x328] sm:$0xff]
      %v2191 = vld [vmem:[%s1 + $0x330] sm:$0xff]
      %v2192 = vld [vmem:[%s1 + $0x338] sm:$0xff]
      %v2193 = vld [vmem:[%s1 + $0x340] sm:$0xff]
      %v2194 = vld [vmem:[%s1 + $0x348] sm:$0xff]
      %v2195 = vld [vmem:[%s1 + $0x350] sm:$0xff]
      %v2196 = vld [vmem:[%s1 + $0x358] sm:$0xff]
      %v2197 = vld [vmem:[%s1 + $0x360] sm:$0xff]
      %v2198 = vld [vmem:[%s1 + $0x368] sm:$0xff]
      %v2199 = vld [vmem:[%s1 + $0x370] sm:$0xff]
      %v2200 = vld [vmem:[%s1 + $0x378] sm:$0xff]
      %v2201 = vld [vmem:[%s1 + $0x380] sm:$0xff]
      %v2202 = vld [vmem:[%s1 + $0x388] sm:$0xff]
      %v2203 = vld [vmem:[%s1 + $0x390] sm:$0xff]
      %v2204 = vld [vmem:[%s1 + $0x398] sm:$0xff]
      %v2205 = vld [vmem:[%s1 + $0x3a0] sm:$0xff]
      %v2206 = vld [vmem:[%s1 + $0x3a8] sm:$0xff]
      %v2207 = vld [vmem:[%s1 + $0x3b0] sm:$0xff]
      %v2208 = vld [vmem:[%s1 + $0x3b8] sm:$0xff]
      %v2209 = vld [vmem:[%s1 + $0x3c0] sm:$0xff]
      %v2210 = vld [vmem:[%s1 + $0x3c8] sm:$0xff]
      %v2211 = vld [vmem:[%s1 + $0x3d0] sm:$0xff]
      %v2212 = vld [vmem:[%s1 + $0x3d8] sm:$0xff]
      %v2213 = vld [vmem:[%s1 + $0x3e0] sm:$0xff]
      %v2214 = vld [vmem:[%s1 + $0x3e8] sm:$0xff]
      %v2215 = vld [vmem:[%s1 + $0x3f0] sm:$0xff]
      %v2216 = vld [vmem:[%s1 + $0x3f8] sm:$0xff]
      %v2217 = vld [vmem:[%s2 + $0x300] sm:$0xff]
      %v2218 = vld [vmem:[%s2 + $0x308] sm:$0xff]
      %v2219 = vld [vmem:[%s2 + $0x310] sm:$0xff]
      %v2220 = vld [vmem:[%s2 + $0x318] sm:$0xff]
      %v2221 = vld [vmem:[%s2 + $0x320] sm:$0xff]
      %v2222 = vld [vmem:[%s2 + $0x328] sm:$0xff]
      %v2223 = vld [vmem:[%s2 + $0x330] sm:$0xff]
      %v2224 = vld [vmem:[%s2 + $0x338] sm:$0xff]
      %v2225 = vld [vmem:[%s2 + $0x340] sm:$0xff]
      %v2226 = vld [vmem:[%s2 + $0x348] sm:$0xff]
      %v2227 = vld [vmem:[%s2 + $0x350] sm:$0xff]
      %v2228 = vld [vmem:[%s2 + $0x358] sm:$0xff]
      %v2229 = vld [vmem:[%s2 + $0x360] sm:$0xff]
      %v2230 = vld [vmem:[%s2 + $0x368] sm:$0xff]
      %v2231 = vld [vmem:[%s2 + $0x370] sm:$0xff]
      %v2232 = vld [vmem:[%s2 + $0x378] sm:$0xff]
      %v2233 = vld [vmem:[%s2 + $0x380] sm:$0xff]
      %v2234 = vld [vmem:[%s2 + $0x388] sm:$0xff]
      %v2235 = vld [vmem:[%s2 + $0x390] sm:$0xff]
      %v2236 = vld [vmem:[%s2 + $0x398] sm:$0xff]
      %v2237 = vld [vmem:[%s2 + $0x3a0] sm:$0xff]
      %v2238 = vld [vmem:[%s2 + $0x3a8] sm:$0xff]
      %v2239 = vld [vmem:[%s2 + $0x3b0] sm:$0xff]
      %v2240 = vld [vmem:[%s2 + $0x3b8] sm:$0xff]
      %v2241 = vld [vmem:[%s2 + $0x3c0] sm:$0xff]
      %v2242 = vld [vmem:[%s2 + $0x3c8] sm:$0xff]
      %v2243 = vld [vmem:[%s2 + $0x3d0] sm:$0xff]
      %v2244 = vld [vmem:[%s2 + $0x3d8] sm:$0xff]
      %v2245 = vld [vmem:[%s2 + $0x3e0] sm:$0xff]
      %v2246 = vld [vmem:[%s2 + $0x3e8] sm:$0xff]
      %v2247 = vld [vmem:[%s2 + $0x3f0] sm:$0xff]
      %v2248 = vld [vmem:[%s2 + $0x3f8] sm:$0xff]
      %2250 = vset.pattern.permute.xlu0 0
      %2251 = vperm.xlu0 %2250, %v2185
      %v2252 = vpop.permute.xlu0 %2251
      %2255 = vset.pattern.permute.xlu0 0
      %2256 = vperm.xlu0 %2255, %v2186
      %v2257 = vpop.permute.xlu0 %2256
      %2260 = vset.pattern.permute.xlu0 0
      %2261 = vperm.xlu0 %2260, %v2187
      %v2262 = vpop.permute.xlu0 %2261
      %2265 = vset.pattern.permute.xlu0 0
      %2266 = vperm.xlu0 %2265, %v2188
      %v2267 = vpop.permute.xlu0 %2266
      %2270 = vset.pattern.permute.xlu0 0
      %2271 = vperm.xlu0 %2270, %v2189
      %v2272 = vpop.permute.xlu0 %2271
      %2275 = vset.pattern.permute.xlu0 0
      %2276 = vperm.xlu0 %2275, %v2190
      %v2277 = vpop.permute.xlu0 %2276
      %2280 = vset.pattern.permute.xlu0 0
      %2281 = vperm.xlu0 %2280, %v2191
      %v2282 = vpop.permute.xlu0 %2281
      %2285 = vset.pattern.permute.xlu0 0
      %2286 = vperm.xlu0 %2285, %v2192
      %v2287 = vpop.permute.xlu0 %2286
      %2290 = vset.pattern.permute.xlu0 0
      %2291 = vperm.xlu0 %2290, %v2193
      %v2292 = vpop.permute.xlu0 %2291
      %2295 = vset.pattern.permute.xlu0 0
      %2296 = vperm.xlu0 %2295, %v2194
      %v2297 = vpop.permute.xlu0 %2296
      %2300 = vset.pattern.permute.xlu0 0
      %2301 = vperm.xlu0 %2300, %v2195
      %v2302 = vpop.permute.xlu0 %2301
      %2305 = vset.pattern.permute.xlu0 0
      %2306 = vperm.xlu0 %2305, %v2196
      %v2307 = vpop.permute.xlu0 %2306
      %2310 = vset.pattern.permute.xlu0 0
      %2311 = vperm.xlu0 %2310, %v2197
      %v2312 = vpop.permute.xlu0 %2311
      %2315 = vset.pattern.permute.xlu0 0
      %2316 = vperm.xlu0 %2315, %v2198
      %v2317 = vpop.permute.xlu0 %2316
      %2320 = vset.pattern.permute.xlu0 0
      %2321 = vperm.xlu0 %2320, %v2199
      %v2322 = vpop.permute.xlu0 %2321
      %2325 = vset.pattern.permute.xlu0 0
      %2326 = vperm.xlu0 %2325, %v2200
      %v2327 = vpop.permute.xlu0 %2326
      %2330 = vset.pattern.permute.xlu0 0
      %2331 = vperm.xlu0 %2330, %v2201
      %v2332 = vpop.permute.xlu0 %2331
      %2335 = vset.pattern.permute.xlu0 0
      %2336 = vperm.xlu0 %2335, %v2202
      %v2337 = vpop.permute.xlu0 %2336
      %2340 = vset.pattern.permute.xlu0 0
      %2341 = vperm.xlu0 %2340, %v2203
      %v2342 = vpop.permute.xlu0 %2341
      %2345 = vset.pattern.permute.xlu0 0
      %2346 = vperm.xlu0 %2345, %v2204
      %v2347 = vpop.permute.xlu0 %2346
      %2350 = vset.pattern.permute.xlu0 0
      %2351 = vperm.xlu0 %2350, %v2205
      %v2352 = vpop.permute.xlu0 %2351
      %2355 = vset.pattern.permute.xlu0 0
      %2356 = vperm.xlu0 %2355, %v2206
      %v2357 = vpop.permute.xlu0 %2356
      %2360 = vset.pattern.permute.xlu0 0
      %2361 = vperm.xlu0 %2360, %v2207
      %v2362 = vpop.permute.xlu0 %2361
      %2365 = vset.pattern.permute.xlu0 0
      %2366 = vperm.xlu0 %2365, %v2208
      %v2367 = vpop.permute.xlu0 %2366
      %2370 = vset.pattern.permute.xlu0 0
      %2371 = vperm.xlu0 %2370, %v2209
      %v2372 = vpop.permute.xlu0 %2371
      %2375 = vset.pattern.permute.xlu0 0
      %2376 = vperm.xlu0 %2375, %v2210
      %v2377 = vpop.permute.xlu0 %2376
      %2380 = vset.pattern.permute.xlu0 0
      %2381 = vperm.xlu0 %2380, %v2211
      %v2382 = vpop.permute.xlu0 %2381
      %2385 = vset.pattern.permute.xlu0 0
      %2386 = vperm.xlu0 %2385, %v2212
      %v2387 = vpop.permute.xlu0 %2386
      %2390 = vset.pattern.permute.xlu0 0
      %2391 = vperm.xlu0 %2390, %v2213
      %v2392 = vpop.permute.xlu0 %2391
      %2395 = vset.pattern.permute.xlu0 0
      %2396 = vperm.xlu0 %2395, %v2214
      %v2397 = vpop.permute.xlu0 %2396
      %2400 = vset.pattern.permute.xlu0 0
      %2401 = vperm.xlu0 %2400, %v2215
      %v2402 = vpop.permute.xlu0 %2401
      %2405 = vset.pattern.permute.xlu0 0
      %2406 = vperm.xlu0 %2405, %v2216
      %v2407 = vpop.permute.xlu0 %2406
      %v2409 = vmul.f32 %v2252, %v453
      %v2410 = vmul.f32 %v2252, %v457
      %v2411 = vmul.f32 %v2257, %v453
      %v2412 = vmul.f32 %v2257, %v457
      %v2413 = vmul.f32 %v2262, %v453
      %v2414 = vmul.f32 %v2262, %v457
      %v2415 = vmul.f32 %v2267, %v453
      %v2416 = vmul.f32 %v2267, %v457
      %v2417 = vmul.f32 %v2272, %v453
      %v2418 = vmul.f32 %v2272, %v457
      %v2419 = vmul.f32 %v2277, %v453
      %v2420 = vmul.f32 %v2277, %v457
      %v2421 = vmul.f32 %v2282, %v453
      %v2422 = vmul.f32 %v2282, %v457
      %v2423 = vmul.f32 %v2287, %v453
      %v2424 = vmul.f32 %v2287, %v457
      %v2425 = vmul.f32 %v2292, %v453
      %v2426 = vmul.f32 %v2292, %v457
      %v2427 = vmul.f32 %v2297, %v453
      %v2428 = vmul.f32 %v2297, %v457
      %v2429 = vmul.f32 %v2302, %v453
      %v2430 = vmul.f32 %v2302, %v457
      %v2431 = vmul.f32 %v2307, %v453
      %v2432 = vmul.f32 %v2307, %v457
      %v2433 = vmul.f32 %v2312, %v453
      %v2434 = vmul.f32 %v2312, %v457
      %v2435 = vmul.f32 %v2317, %v453
      %v2436 = vmul.f32 %v2317, %v457
      %v2437 = vmul.f32 %v2322, %v453
      %v2438 = vmul.f32 %v2322, %v457
      %v2439 = vmul.f32 %v2327, %v453
      %v2440 = vmul.f32 %v2327, %v457
      %v2441 = vmul.f32 %v2332, %v453
      %v2442 = vmul.f32 %v2332, %v457
      %v2443 = vmul.f32 %v2337, %v453
      %v2444 = vmul.f32 %v2337, %v457
      %v2445 = vmul.f32 %v2342, %v453
      %v2446 = vmul.f32 %v2342, %v457
      %v2447 = vmul.f32 %v2347, %v453
      %v2448 = vmul.f32 %v2347, %v457
      %v2449 = vmul.f32 %v2352, %v453
      %v2450 = vmul.f32 %v2352, %v457
      %v2451 = vmul.f32 %v2357, %v453
      %v2452 = vmul.f32 %v2357, %v457
      %v2453 = vmul.f32 %v2362, %v453
      %v2454 = vmul.f32 %v2362, %v457
      %v2455 = vmul.f32 %v2367, %v453
      %v2456 = vmul.f32 %v2367, %v457
      %v2457 = vmul.f32 %v2372, %v453
      %v2458 = vmul.f32 %v2372, %v457
      %v2459 = vmul.f32 %v2377, %v453
      %v2460 = vmul.f32 %v2377, %v457
      %v2461 = vmul.f32 %v2382, %v453
      %v2462 = vmul.f32 %v2382, %v457
      %v2463 = vmul.f32 %v2387, %v453
      %v2464 = vmul.f32 %v2387, %v457
      %v2465 = vmul.f32 %v2392, %v453
      %v2466 = vmul.f32 %v2392, %v457
      %v2467 = vmul.f32 %v2397, %v453
      %v2468 = vmul.f32 %v2397, %v457
      %v2469 = vmul.f32 %v2402, %v453
      %v2470 = vmul.f32 %v2402, %v457
      %v2471 = vmul.f32 %v2407, %v453
      %v2472 = vmul.f32 %v2407, %v457
      %2474 = vset.pattern.permute.xlu0 0
      %2475 = vperm.xlu0 %2474, %v2217
      %v2476 = vpop.permute.xlu0 %2475
      %2479 = vset.pattern.permute.xlu0 0
      %2480 = vperm.xlu0 %2479, %v2218
      %v2481 = vpop.permute.xlu0 %2480
      %2484 = vset.pattern.permute.xlu0 0
      %2485 = vperm.xlu0 %2484, %v2219
      %v2486 = vpop.permute.xlu0 %2485
      %2489 = vset.pattern.permute.xlu0 0
      %2490 = vperm.xlu0 %2489, %v2220
      %v2491 = vpop.permute.xlu0 %2490
      %2494 = vset.pattern.permute.xlu0 0
      %2495 = vperm.xlu0 %2494, %v2221
      %v2496 = vpop.permute.xlu0 %2495
      %2499 = vset.pattern.permute.xlu0 0
      %2500 = vperm.xlu0 %2499, %v2222
      %v2501 = vpop.permute.xlu0 %2500
      %2504 = vset.pattern.permute.xlu0 0
      %2505 = vperm.xlu0 %2504, %v2223
      %v2506 = vpop.permute.xlu0 %2505
      %2509 = vset.pattern.permute.xlu0 0
      %2510 = vperm.xlu0 %2509, %v2224
      %v2511 = vpop.permute.xlu0 %2510
      %2514 = vset.pattern.permute.xlu0 0
      %2515 = vperm.xlu0 %2514, %v2225
      %v2516 = vpop.permute.xlu0 %2515
      %2519 = vset.pattern.permute.xlu0 0
      %2520 = vperm.xlu0 %2519, %v2226
      %v2521 = vpop.permute.xlu0 %2520
      %2524 = vset.pattern.permute.xlu0 0
      %2525 = vperm.xlu0 %2524, %v2227
      %v2526 = vpop.permute.xlu0 %2525
      %2529 = vset.pattern.permute.xlu0 0
      %2530 = vperm.xlu0 %2529, %v2228
      %v2531 = vpop.permute.xlu0 %2530
      %2534 = vset.pattern.permute.xlu0 0
      %2535 = vperm.xlu0 %2534, %v2229
      %v2536 = vpop.permute.xlu0 %2535
      %2539 = vset.pattern.permute.xlu0 0
      %2540 = vperm.xlu0 %2539, %v2230
      %v2541 = vpop.permute.xlu0 %2540
      %2544 = vset.pattern.permute.xlu0 0
      %2545 = vperm.xlu0 %2544, %v2231
      %v2546 = vpop.permute.xlu0 %2545
      %2549 = vset.pattern.permute.xlu0 0
      %2550 = vperm.xlu0 %2549, %v2232
      %v2551 = vpop.permute.xlu0 %2550
      %2554 = vset.pattern.permute.xlu0 0
      %2555 = vperm.xlu0 %2554, %v2233
      %v2556 = vpop.permute.xlu0 %2555
      %2559 = vset.pattern.permute.xlu0 0
      %2560 = vperm.xlu0 %2559, %v2234
      %v2561 = vpop.permute.xlu0 %2560
      %2564 = vset.pattern.permute.xlu0 0
      %2565 = vperm.xlu0 %2564, %v2235
      %v2566 = vpop.permute.xlu0 %2565
      %2569 = vset.pattern.permute.xlu0 0
      %2570 = vperm.xlu0 %2569, %v2236
      %v2571 = vpop.permute.xlu0 %2570
      %2574 = vset.pattern.permute.xlu0 0
      %2575 = vperm.xlu0 %2574, %v2237
      %v2576 = vpop.permute.xlu0 %2575
      %2579 = vset.pattern.permute.xlu0 0
      %2580 = vperm.xlu0 %2579, %v2238
      %v2581 = vpop.permute.xlu0 %2580
      %2584 = vset.pattern.permute.xlu0 0
      %2585 = vperm.xlu0 %2584, %v2239
      %v2586 = vpop.permute.xlu0 %2585
      %2589 = vset.pattern.permute.xlu0 0
      %2590 = vperm.xlu0 %2589, %v2240
      %v2591 = vpop.permute.xlu0 %2590
      %2594 = vset.pattern.permute.xlu0 0
      %2595 = vperm.xlu0 %2594, %v2241
      %v2596 = vpop.permute.xlu0 %2595
      %2599 = vset.pattern.permute.xlu0 0
      %2600 = vperm.xlu0 %2599, %v2242
      %v2601 = vpop.permute.xlu0 %2600
      %2604 = vset.pattern.permute.xlu0 0
      %2605 = vperm.xlu0 %2604, %v2243
      %v2606 = vpop.permute.xlu0 %2605
      %2609 = vset.pattern.permute.xlu0 0
      %2610 = vperm.xlu0 %2609, %v2244
      %v2611 = vpop.permute.xlu0 %2610
      %2614 = vset.pattern.permute.xlu0 0
      %2615 = vperm.xlu0 %2614, %v2245
      %v2616 = vpop.permute.xlu0 %2615
      %2619 = vset.pattern.permute.xlu0 0
      %2620 = vperm.xlu0 %2619, %v2246
      %v2621 = vpop.permute.xlu0 %2620
      %2624 = vset.pattern.permute.xlu0 0
      %2625 = vperm.xlu0 %2624, %v2247
      %v2626 = vpop.permute.xlu0 %2625
      %2629 = vset.pattern.permute.xlu0 0
      %2630 = vperm.xlu0 %2629, %v2248
      %v2631 = vpop.permute.xlu0 %2630
      %v2633 = vadd.f32 %v2409, %v2476
      %v2634 = vadd.f32 %v2410, %v2476
      %v2635 = vadd.f32 %v2411, %v2481
      %v2636 = vadd.f32 %v2412, %v2481
      %v2637 = vadd.f32 %v2413, %v2486
      %v2638 = vadd.f32 %v2414, %v2486
      %v2639 = vadd.f32 %v2415, %v2491
      %v2640 = vadd.f32 %v2416, %v2491
      %v2641 = vadd.f32 %v2417, %v2496
      %v2642 = vadd.f32 %v2418, %v2496
      %v2643 = vadd.f32 %v2419, %v2501
      %v2644 = vadd.f32 %v2420, %v2501
      %v2645 = vadd.f32 %v2421, %v2506
      %v2646 = vadd.f32 %v2422, %v2506
      %v2647 = vadd.f32 %v2423, %v2511
      %v2648 = vadd.f32 %v2424, %v2511
      %v2649 = vadd.f32 %v2425, %v2516
      %v2650 = vadd.f32 %v2426, %v2516
      %v2651 = vadd.f32 %v2427, %v2521
      %v2652 = vadd.f32 %v2428, %v2521
      %v2653 = vadd.f32 %v2429, %v2526
      %v2654 = vadd.f32 %v2430, %v2526
      %v2655 = vadd.f32 %v2431, %v2531
      %v2656 = vadd.f32 %v2432, %v2531
      %v2657 = vadd.f32 %v2433, %v2536
      %v2658 = vadd.f32 %v2434, %v2536
      %v2659 = vadd.f32 %v2435, %v2541
      %v2660 = vadd.f32 %v2436, %v2541
      %v2661 = vadd.f32 %v2437, %v2546
      %v2662 = vadd.f32 %v2438, %v2546
      %v2663 = vadd.f32 %v2439, %v2551
      %v2664 = vadd.f32 %v2440, %v2551
      %v2665 = vadd.f32 %v2441, %v2556
      %v2666 = vadd.f32 %v2442, %v2556
      %v2667 = vadd.f32 %v2443, %v2561
      %v2668 = vadd.f32 %v2444, %v2561
      %v2669 = vadd.f32 %v2445, %v2566
      %v2670 = vadd.f32 %v2446, %v2566
      %v2671 = vadd.f32 %v2447, %v2571
      %v2672 = vadd.f32 %v2448, %v2571
      %v2673 = vadd.f32 %v2449, %v2576
      %v2674 = vadd.f32 %v2450, %v2576
      %v2675 = vadd.f32 %v2451, %v2581
      %v2676 = vadd.f32 %v2452, %v2581
      %v2677 = vadd.f32 %v2453, %v2586
      %v2678 = vadd.f32 %v2454, %v2586
      %v2679 = vadd.f32 %v2455, %v2591
      %v2680 = vadd.f32 %v2456, %v2591
      %v2681 = vadd.f32 %v2457, %v2596
      %v2682 = vadd.f32 %v2458, %v2596
      %v2683 = vadd.f32 %v2459, %v2601
      %v2684 = vadd.f32 %v2460, %v2601
      %v2685 = vadd.f32 %v2461, %v2606
      %v2686 = vadd.f32 %v2462, %v2606
      %v2687 = vadd.f32 %v2463, %v2611
      %v2688 = vadd.f32 %v2464, %v2611
      %v2689 = vadd.f32 %v2465, %v2616
      %v2690 = vadd.f32 %v2466, %v2616
      %v2691 = vadd.f32 %v2467, %v2621
      %v2692 = vadd.f32 %v2468, %v2621
      %v2693 = vadd.f32 %v2469, %v2626
      %v2694 = vadd.f32 %v2470, %v2626
      %v2695 = vadd.f32 %v2471, %v2631
      %v2696 = vadd.f32 %v2472, %v2631
      %v2697 = vmax.f32 %v2633, 0.0
      %v2698 = vmax.f32 %v2634, 0.0
      %v2699 = vmax.f32 %v2635, 0.0
      %v2700 = vmax.f32 %v2636, 0.0
      %v2701 = vmax.f32 %v2637, 0.0
      %v2702 = vmax.f32 %v2638, 0.0
      %v2703 = vmax.f32 %v2639, 0.0
      %v2704 = vmax.f32 %v2640, 0.0
      %v2705 = vmax.f32 %v2641, 0.0
      %v2706 = vmax.f32 %v2642, 0.0
      %v2707 = vmax.f32 %v2643, 0.0
      %v2708 = vmax.f32 %v2644, 0.0
      %v2709 = vmax.f32 %v2645, 0.0
      %v2710 = vmax.f32 %v2646, 0.0
      %v2711 = vmax.f32 %v2647, 0.0
      %v2712 = vmax.f32 %v2648, 0.0
      %v2713 = vmax.f32 %v2649, 0.0
      %v2714 = vmax.f32 %v2650, 0.0
      %v2715 = vmax.f32 %v2651, 0.0
      %v2716 = vmax.f32 %v2652, 0.0
      %v2717 = vmax.f32 %v2653, 0.0
      %v2718 = vmax.f32 %v2654, 0.0
      %v2719 = vmax.f32 %v2655, 0.0
      %v2720 = vmax.f32 %v2656, 0.0
      %v2721 = vmax.f32 %v2657, 0.0
      %v2722 = vmax.f32 %v2658, 0.0
      %v2723 = vmax.f32 %v2659, 0.0
      %v2724 = vmax.f32 %v2660, 0.0
      %v2725 = vmax.f32 %v2661, 0.0
      %v2726 = vmax.f32 %v2662, 0.0
      %v2727 = vmax.f32 %v2663, 0.0
      %v2728 = vmax.f32 %v2664, 0.0
      %v2729 = vmax.f32 %v2665, 0.0
      %v2730 = vmax.f32 %v2666, 0.0
      %v2731 = vmax.f32 %v2667, 0.0
      %v2732 = vmax.f32 %v2668, 0.0
      %v2733 = vmax.f32 %v2669, 0.0
      %v2734 = vmax.f32 %v2670, 0.0
      %v2735 = vmax.f32 %v2671, 0.0
      %v2736 = vmax.f32 %v2672, 0.0
      %v2737 = vmax.f32 %v2673, 0.0
      %v2738 = vmax.f32 %v2674, 0.0
      %v2739 = vmax.f32 %v2675, 0.0
      %v2740 = vmax.f32 %v2676, 0.0
      %v2741 = vmax.f32 %v2677, 0.0
      %v2742 = vmax.f32 %v2678, 0.0
      %v2743 = vmax.f32 %v2679, 0.0
      %v2744 = vmax.f32 %v2680, 0.0
      %v2745 = vmax.f32 %v2681, 0.0
      %v2746 = vmax.f32 %v2682, 0.0
      %v2747 = vmax.f32 %v2683, 0.0
      %v2748 = vmax.f32 %v2684, 0.0
      %v2749 = vmax.f32 %v2685, 0.0
      %v2750 = vmax.f32 %v2686, 0.0
      %v2751 = vmax.f32 %v2687, 0.0
      %v2752 = vmax.f32 %v2688, 0.0
      %v2753 = vmax.f32 %v2689, 0.0
      %v2754 = vmax.f32 %v2690, 0.0
      %v2755 = vmax.f32 %v2691, 0.0
      %v2756 = vmax.f32 %v2692, 0.0
      %v2757 = vmax.f32 %v2693, 0.0
      %v2758 = vmax.f32 %v2694, 0.0
      %v2759 = vmax.f32 %v2695, 0.0
      %v2760 = vmax.f32 %v2696, 0.0
      %v2761 = vld [vmem:[%s3 + $0x30] sm:$0xff]
      %v2762 = vld [vmem:[%s3 + $0x38] sm:$0xff]
      %2763 = vmatprep.subr.mxu0 %v2698
      %2764 = vmatpush1.msra.mxu0 %v2697
      %2765 = vmatprep.subr.mxu0 %v2700
      %2766 = vmatpush1.msra.mxu0 %v2699
      %2767 = vmatprep.subr.mxu0 %v2702
      %2768 = vmatpush1.msra.mxu0 %v2701
      %2769 = vmatprep.subr.mxu0 %v2704
      %2770 = vmatpush1.msra.mxu0 %v2703
      %2771 = vmatprep.subr.mxu0 %v2706
      %2772 = vmatpush1.msra.mxu0 %v2705
      %2773 = vmatprep.subr.mxu0 %v2708
      %2774 = vmatpush1.msra.mxu0 %v2707
      %2775 = vmatprep.subr.mxu0 %v2710
      %2776 = vmatpush1.msra.mxu0 %v2709
      %2777 = vmatprep.subr.mxu0 %v2712
      %2778 = vmatpush1.msra.mxu0 %v2711
      %2779 = vmatprep.subr.mxu0 %v2714
      %2780 = vmatpush1.msra.mxu0 %v2713
      %2781 = vmatprep.subr.mxu0 %v2716
      %2782 = vmatpush1.msra.mxu0 %v2715
      %2783 = vmatprep.subr.mxu0 %v2718
      %2784 = vmatpush1.msra.mxu0 %v2717
      %2785 = vmatprep.subr.mxu0 %v2720
      %2786 = vmatpush1.msra.mxu0 %v2719
      %2787 = vmatprep.subr.mxu0 %v2722
      %2788 = vmatpush1.msra.mxu0 %v2721
      %2789 = vmatprep.subr.mxu0 %v2724
      %2790 = vmatpush1.msra.mxu0 %v2723
      %2791 = vmatprep.subr.mxu0 %v2726
      %2792 = vmatpush1.msra.mxu0 %v2725
      %2793 = vmatprep.subr.mxu0 %v2728
      %2794 = vmatpush1.msra.mxu0 %v2727
      %2795 = vmatprep.subr.mxu0 %v2730
      %2796 = vmatpush1.msra.mxu0 %v2729
      %2797 = vmatprep.subr.mxu0 %v2732
      %2798 = vmatpush1.msra.mxu0 %v2731
      %2799 = vmatprep.subr.mxu0 %v2734
      %2800 = vmatpush1.msra.mxu0 %v2733
      %2801 = vmatprep.subr.mxu0 %v2736
      %2802 = vmatpush1.msra.mxu0 %v2735
      %2803 = vmatprep.subr.mxu0 %v2738
      %2804 = vmatpush1.msra.mxu0 %v2737
      %2805 = vmatprep.subr.mxu0 %v2740
      %2806 = vmatpush1.msra.mxu0 %v2739
      %2807 = vmatprep.subr.mxu0 %v2742
      %2808 = vmatpush1.msra.mxu0 %v2741
      %2809 = vmatprep.subr.mxu0 %v2744
      %2810 = vmatpush1.msra.mxu0 %v2743
      %2811 = vmatprep.subr.mxu0 %v2746
      %2812 = vmatpush1.msra.mxu0 %v2745
      %2813 = vmatprep.subr.mxu0 %v2748
      %2814 = vmatpush1.msra.mxu0 %v2747
      %2815 = vmatprep.subr.mxu0 %v2750
      %2816 = vmatpush1.msra.mxu0 %v2749
      %2817 = vmatprep.subr.mxu0 %v2752
      %2818 = vmatpush1.msra.mxu0 %v2751
      %2819 = vmatprep.subr.mxu0 %v2754
      %2820 = vmatpush1.msra.mxu0 %v2753
      %2821 = vmatprep.subr.mxu0 %v2756
      %2822 = vmatpush1.msra.mxu0 %v2755
      %2823 = vmatprep.subr.mxu0 %v2758
      %2824 = vmatpush1.msra.mxu0 %v2757
      %2825 = vmatprep.subr.mxu0 %v2760
      %2826 = vmatpush1.msra.mxu0 %v2759
      %2827 = vmatprep.mubr.f32.mxu0 %v2762
      %2828 = vmatmul.mubr.f32.gmra.mrb[0].mxu0 %v2761
      %v2829 = vpop.f32.mrb[0].mxu0
      %v2830 = vadd.f32 0.0, %v2829
      %v2831 = vpop.f32.mrb[0].mxu0
      %v2832 = vadd.f32 0.0, %v2831
      %2833 = vdwg.mxu0
      %v2834 = vadd.f32 %v2183, %v2830
      %v2835 = vadd.f32 %v2184, %v2832
      %s2836 = sld [smem:[#allocation2]]
      %v2837 = vstv %s2836
      %v2838 = vadd.f32 %v2834, %v2837
      %v2839 = vadd.f32 %v2835, %v2837
      %v2842 = vcombine.low %v2838, %v2839
      %v2844 = vunpack.c.l.s4 1966171168
      %v2845 = vunpack.c.0.s8 %v2844
      %v2846 = vlaneseq
      %v2847 = vshrl.u32 %v2846, 7
      %v2848 = vsub.s32 %v2845, %v2847
      %v2849 = vrot.slane %v2842, %v2848
      %v2851 = vunpack.c.l.s4 1966171168
      %v2852 = vunpack.c.0.s8 %v2851
      %v2853 = vlaneseq
      %v2854 = vshrl.u32 %v2853, 7
      %v2855 = vsub.s32 %v2852, %v2854
      %v2856 = vrot.slane %v2849, %v2855
      %v2858 = vlaneseq
      %vm2859 = vcmp.ge.s32.totalorder %v2858, 0
      %vm2860 = vcmp.lt.s32.totalorder %v2858, 256
      %vm2861 = vmand %vm2859, %vm2860
      %2862 = vst.msk [vmem:[%s222] sm:$0x3] %vm2861, %v2856
      %s2863 = smul.u32 2, %s17
      %p2864 = scmp.lt.s32.totalorder %s2863, 3
      %s2865 = scalar_select %p2864, %s2863, 3
      %s2866 = scalar_lea.vmem %s5, %s2865
      // Predicated region
      $region41: #{linear_regression_forward.1} parent=39 // pred_check
        %p2867 = pneg %p145
      $region42: #{linear_regression_forward.1} parent=39 // pred_check_branch
        %2869 = sbr.rel (%p2867) target = $region44
      $region43: #{linear_regression_forward.1} parent=39 // pred_region
        %s2870 = smul.u32 2, %s17
      $region44: #{linear_regression_forward.1} parent=39 // pred_fallthru
        _
    $region40: #{linear_regression_forward.1} parent=5 // pred_fallthru
      _
    %p2871 = scmp.le.s32.totalorder 2, %s12
    // Predicated region
    $region45: #{linear_regression_forward.1} parent=5 // pred_check
      %p2872 = pneg %p2871
    $region46: #{linear_regression_forward.1} parent=5 // pred_check_branch
      %2874 = sbr.rel (%p2872) target = $region48
    $region47: #{linear_regression_forward.1} parent=5 // pred_region
      %s2875 = ssub.s32 %s12, 2
      // Predicated region
      $region49: #{linear_regression_forward.1} parent=47 // pred_check
        %p2876 = pneg %p151
      $region50: #{linear_regression_forward.1} parent=47 // pred_check_branch
        %2878 = sbr.rel (%p2876) target = $region52
      $region51: #{linear_regression_forward.1} parent=47 // pred_region
        %s2879 = smul.u32 2, %s18
        %p2880 = scmp.lt.s32.totalorder %s2879, 3
        %s2881 = scalar_select %p2880, %s2879, 3
        %s2882 = scalar_lea.vmem %s5, %s2881
      $region52: #{linear_regression_forward.1} parent=47 // pred_fallthru
        _
    $region48: #{linear_regression_forward.1} parent=5 // pred_fallthru
      _
  $region6: #{linear_regression_forward.1} parent=0 // loop_footer
    %s16 = sadd.s32 1, %s12
  $region7: #{linear_regression_forward.1} parent=0 // loop_footer_branch
    %11 = sbr.rel target = $region3
  $region8: #{linear_regression_forward.1} parent=0 // loop_exit
    _

</llo_original>
